<compile_context>
chip_gen: v7x
topology: tpu7x:2x2x1
jax: 0.10.0
libtpu: 0.0.40
codegen_flags: <defaults>
</compile_context>

<pallas_src>
import functools

import jax
import jax.numpy as jnp
from jax.experimental import pallas as pl
from jax.experimental.pallas import tpu as pltpu


# ---------------------------------------------------------------------------
# Kernels
# ---------------------------------------------------------------------------

def _lstm_cell_kernel(xh_ref, c_ref, wg_ref, bg_ref,
                      h_out_ref, c_out_ref, h_bf16_ref):
    """Fused LSTM cell: one MXU contraction + gate nonlinearities.

    xh_ref:     (B, E+H) bf16   [x, h_prev] concatenated
    c_ref:      (B, H)   f32    previous cell state
    wg_ref:     (E+H, 4H) bf16  fused gate weights [W_ih^T; W_hh^T] (i,f,g,o)
    bg_ref:     (1, 4H)  f32    combined bias b_ih + b_hh
    h_out_ref:  (B, H)   f32    new hidden state
    c_out_ref:  (B, H)   f32    new cell state (aliases c_ref's buffer)
    h_bf16_ref: (B, H)   bf16   new hidden state, MXU-ready for the projection
    """
    hsz = c_ref.shape[-1]
    # gates = [x, h] @ W_g + (b_ih + b_hh)  -> (B, 4H), f32 accumulation.
    gates = (jnp.dot(xh_ref[...], wg_ref[...],
                     preferred_element_type=jnp.float32) + bg_ref[...])
    # Lane-aligned slices when H % 128 == 0 (PyTorch gate order i, f, g, o).
    i_gate = jax.nn.sigmoid(gates[:, 0 * hsz:1 * hsz])
    f_gate = jax.nn.sigmoid(gates[:, 1 * hsz:2 * hsz])
    g_gate = jnp.tanh(gates[:, 2 * hsz:3 * hsz])
    o_gate = jax.nn.sigmoid(gates[:, 3 * hsz:4 * hsz])

    c_new = f_gate * c_ref[...] + i_gate * g_gate
    h_new = o_gate * jnp.tanh(c_new)

    c_out_ref[...] = c_new
    h_out_ref[...] = h_new
    h_bf16_ref[...] = h_new.astype(jnp.bfloat16)


def _proj_kernel(h_ref, w_ref, b_ref, logits_ref):
    """Output projection for one vocab tile: logits = h_new @ W_out_tile + b."""
    logits_ref[...] = (jnp.dot(h_ref[...], w_ref[...],
                               preferred_element_type=jnp.float32)
                       + b_ref[...])


# ---------------------------------------------------------------------------
# Sizing helpers
# ---------------------------------------------------------------------------

def _usable_vmem_bytes():
    """Generation-aware VMEM budget (scoped-limit target, not a reservation)."""
    try:
        cap = pltpu.get_tpu_info().vmem_capacity_bytes
    except Exception:       # fall back if the query is unavailable
        cap = 64 << 20      # conservative: v7x physical VMEM
    # ~56 MiB usable on v7x (64 MiB), ~100 MiB on v5e/v6e (128 MiB).
    return int(min(cap - (8 << 20), 100 << 20))


def _pick_tile_v(vocab, hid, vmem_usable):
    """Byte-sized vocab tile for the W_out stream (vocab must be % 128 == 0)."""
    w_lane_bytes = 2 * hid                                   # bf16 bytes / lane
    # Keep the whole projection weight resident (grid of 1) when it fits.
    if vocab * w_lane_bytes <= int(0.6 * vmem_usable):
        return vocab
    # Otherwise stream it: target >= ~2 MiB of weight per tile and >= 512
    # lanes (no upper lane cap), bounded by 3-deep buffering fitting in VMEM.
    target = max(512, (2 << 20) // w_lane_bytes)
    vmem_cap = max(512, (vmem_usable - (4 << 20)) // (3 * w_lane_bytes))
    lanes = int(min(vocab, target, vmem_cap))
    lanes = max(128, (lanes // 128) * 128)
    # Largest multiple of 128 <= lanes that divides vocab.
    while lanes > 128 and vocab % lanes:
        lanes -= 128
    return lanes


# ---------------------------------------------------------------------------
# Decode step wrapper
# ---------------------------------------------------------------------------

def lstm_decoder_step(tgt_token, hidden, cell, params, *, tile_v=None):
    """One decode step; mirrors LSTMDecoder.forward.

    tgt_token: (B,) int32 token ids
    hidden:    (1, B, H) float32
    cell:      (1, B, H) float32
    returns (logits (B, V) f32, hidden (1, B, H) f32, cell (1, B, H) f32)
    """
    emb_table = params["embedding"]          # (V, E)    bf16
    w_gates_t = params["w_gates_t"]          # (E+H, 4H) bf16
    b_gates = params["b_gates"]              # (1, 4H)   f32
    w_out_t = params["w_out_t"]              # (H, V)    bf16
    b_out = params["b_out"]                  # (1, V)    f32

    B = tgt_token.shape[0]
    H = hidden.shape[-1]
    V, E = emb_table.shape
    assert V % 128 == 0, "pad the vocab to a multiple of 128 at init time"

    # Embedding lookup (XLA glue, only B*E bytes). padding_idx row is zeroed.
    x = jnp.take(emb_table, tgt_token, axis=0)               # (B, E) bf16
    h_prev = hidden[0].astype(jnp.bfloat16)                  # (B, H) bf16
    c_prev = cell[0]                                         # (B, H) f32
    xh = jnp.concatenate([x, h_prev], axis=-1)               # (B, E+H) bf16

    # Pad batch to a multiple of 8 sublanes (vreg rows / MXU rows).
    b_pad = max(8, ((B + 7) // 8) * 8)
    if b_pad != B:
        pad = ((0, b_pad - B), (0, 0))
        xh = jnp.pad(xh, pad)
        c_prev = jnp.pad(c_prev, pad)

    vmem_usable = _usable_vmem_bytes()

    # ---------------- LSTM cell: tiny grid-less pallas_call -----------------
    # No grid => every operand is single-buffered; the (E+H, 4H) gate weight
    # is DMA'd exactly once and never double-buffered (critical within v7x's
    # 64 MiB VMEM at realistic E/H).
    cell_bytes = (xh.size * 2 + c_prev.size * 4 + w_gates_t.size * 2
                  + b_gates.size * 4 + 4 * b_pad * 4 * H      # gates intermediate
                  + 2 * b_pad * H * 4 + b_pad * H * 2)
    cell_cost = pl.CostEstimate(
        flops=int(2 * b_pad * (E + H) * 4 * H),
        transcendentals=int(5 * b_pad * H),
        bytes_accessed=int(cell_bytes))
    h_new, c_new, h_bf16 = pl.pallas_call(
        _lstm_cell_kernel,
        out_shape=(
            jax.ShapeDtypeStruct((b_pad, H), jnp.float32),   # h_new
            jax.ShapeDtypeStruct((b_pad, H), jnp.float32),   # c_new
            jax.ShapeDtypeStruct((b_pad, H), jnp.bfloat16),  # h_new (MXU-ready)
        ),
        # c_prev (input 1) is updated in place into c_new (output 1); only a
        # true in-place HBM update when B was already a multiple of 8.
        input_output_aliases={1: 1},
        compiler_params=pltpu.CompilerParams(
            vmem_limit_bytes=int(min(vmem_usable,
                                     max(2 * cell_bytes, 4 << 20)))),
        cost_estimate=cell_cost,
    )(xh, c_prev, w_gates_t, b_gates)

    # ---------------- Output projection: byte-sized vocab tiles -------------
    if tile_v is None:
        tile_v = _pick_tile_v(V, H, vmem_usable)
    assert V % tile_v == 0 and tile_v % 128 == 0, "tile_v must divide V, %128==0"
    num_v_tiles = V // tile_v

    proj_cost = pl.CostEstimate(
        flops=int(2 * b_pad * H * V),
        transcendentals=0,
        bytes_accessed=int(b_pad * H * 2 + H * V * 2 + V * 4 + b_pad * V * 4))

    if num_v_tiles == 1:
        # Whole W_out resident in VMEM (v5e/v6e 128 MiB / small-medium vocabs):
        # grid-less call, single-buffered, one DMA per operand, no per-step
        # pipeline overhead at all.
        proj_need = b_pad * H * 2 + H * V * 2 + V * 4 + b_pad * V * 4
        logits = pl.pallas_call(
            _proj_kernel,
            out_shape=jax.ShapeDtypeStruct((b_pad, V), jnp.float32),
            compiler_params=pltpu.CompilerParams(
                vmem_limit_bytes=int(min(vmem_usable,
                                         max(proj_need + (2 << 20), 4 << 20)))),
            cost_estimate=proj_cost,
        )(h_bf16, w_out_t, b_out)
    else:
        # Streamed path: MiB-sized weight tiles, 3-deep pipelining on the
        # streamed operands, V axis "parallel" (shards across v7x's 2 TCs).
        stream_mode = (pl.Buffered(3)
                       if num_v_tiles >= 3 and hasattr(pl, "Buffered") else None)
        n_buf = 3 if stream_mode is not None else 2

        def _spec(shape, index_map, mode=None):
            if mode is None:
                return pl.BlockSpec(shape, index_map)
            return pl.BlockSpec(shape, index_map, pipeline_mode=mode)

        grid_spec = pltpu.PrefetchScalarGridSpec(
            num_scalar_prefetch=0,
            grid=(num_v_tiles,),
            in_specs=[
                # h_new is tiny (B x H bf16) and revisited every step; the big
                # resident operands (gate weights, xh, c) already live in the
                # grid-less cell call above, so nothing here needs Buffered(1).
                _spec((b_pad, H), lambda j: (0, 0)),                 # h_new
                _spec((H, tile_v), lambda j: (0, j), stream_mode),   # W_out tile
                _spec((1, tile_v), lambda j: (0, j), stream_mode),   # b_out tile
            ],
            out_specs=_spec((b_pad, tile_v), lambda j: (0, j), stream_mode),
        )
        proj_need = (2 * b_pad * H * 2
                     + n_buf * (H * tile_v * 2 + tile_v * 4 + b_pad * tile_v * 4))
        logits = pl.pallas_call(
            _proj_kernel,
            out_shape=jax.ShapeDtypeStruct((b_pad, V), jnp.float32),
            grid_spec=grid_spec,
            compiler_params=pltpu.CompilerParams(
                dimension_semantics=("parallel",),
                vmem_limit_bytes=int(min(vmem_usable,
                                         max(proj_need + (2 << 20), 4 << 20)))),
            cost_estimate=proj_cost,
        )(h_bf16, w_out_t, b_out)

    if b_pad != B:
        logits = logits[:B]
        h_new = h_new[:B]
        c_new = c_new[:B]
    return logits, h_new[None, :, :], c_new[None, :, :]


# ---------------------------------------------------------------------------
# Parameter init (synthetic, matches nn.Embedding / nn.LSTM / nn.Linear shapes)
# ---------------------------------------------------------------------------

def init_params(key, vocab_size, emb_size, hid_size, pad_idx):
    """Weights stored bf16 (MXU-native); biases / recurrent state stay f32."""
    ks = jax.random.split(key, 7)
    scale = 0.1
    embedding = scale * jax.random.normal(ks[0], (vocab_size, emb_size), jnp.float32)
    # nn.Embedding(padding_idx=pad_idx) zeroes the pad row at init.
    embedding = embedding.at[pad_idx].set(0.0)

    # nn.LSTM stores weight_ih_l0 (4H, E), weight_hh_l0 (4H, H); we keep the
    # transposes fused into one (E+H, 4H) gate weight (gate order i, f, g, o).
    w_ih = scale * jax.random.normal(ks[1], (4 * hid_size, emb_size), jnp.float32)
    w_hh = scale * jax.random.normal(ks[2], (4 * hid_size, hid_size), jnp.float32)
    b_ih = scale * jax.random.normal(ks[3], (4 * hid_size,), jnp.float32)
    b_hh = scale * jax.random.normal(ks[4], (4 * hid_size,), jnp.float32)

    # nn.Linear(hid, vocab): weight (V, H), bias (V,)
    w_out = scale * jax.random.normal(ks[5], (vocab_size, hid_size), jnp.float32)
    b_out = scale * jax.random.normal(ks[6], (vocab_size,), jnp.float32)

    w_gates_t = jnp.concatenate([w_ih.T, w_hh.T], axis=0)     # (E+H, 4H)

    return {
        "embedding": embedding.astype(jnp.bfloat16),          # (V, E)
        "w_gates_t": w_gates_t.astype(jnp.bfloat16),          # (E+H, 4H)
        "b_gates": (b_ih + b_hh)[None, :],                    # (1, 4H) f32
        "w_out_t": w_out.T.astype(jnp.bfloat16),              # (H, V)
        "b_out": b_out[None, :],                              # (1, V) f32
    }


def _reference_step(tgt_token, hidden, cell, params):
    """Pure-JAX reference of the same forward pass (bf16 operands, f32 accum)."""
    x = jnp.take(params["embedding"], tgt_token, axis=0)      # bf16
    h_prev = hidden[0].astype(jnp.bfloat16)
    c_prev = cell[0]
    H = hidden.shape[-1]
    xh = jnp.concatenate([x, h_prev], axis=-1)
    gates = (jnp.dot(xh, params["w_gates_t"],
                     preferred_element_type=jnp.float32) + params["b_gates"])
    i = jax.nn.sigmoid(gates[:, 0:H])
    f = jax.nn.sigmoid(gates[:, H:2 * H])
    g = jnp.tanh(gates[:, 2 * H:3 * H])
    o = jax.nn.sigmoid(gates[:, 3 * H:4 * H])
    c_new = f * c_prev + i * g
    h_new = o * jnp.tanh(c_new)
    logits = (jnp.dot(h_new.astype(jnp.bfloat16), params["w_out_t"],
                      preferred_element_type=jnp.float32) + params["b_out"])
    return logits, h_new[None], c_new[None]


if __name__ == "__main__":
    # Small TPU-friendly shapes: lane-aligned H and V, batch a multiple of 8.
    VOCAB, EMB, HID, BATCH = 2048, 128, 128, 8
    PAD_IDX = 0   # stand-in for decoder_tokenizer.pad_token_id

    key = jax.random.PRNGKey(0)
    pkey, tkey, hkey, ckey = jax.random.split(key, 4)

    params = init_params(pkey, VOCAB, EMB, HID, PAD_IDX)
    tgt_token = jax.random.randint(tkey, (BATCH,), 0, VOCAB, dtype=jnp.int32)
    hidden = 0.1 * jax.random.normal(hkey, (1, BATCH, HID), jnp.float32)
    cell = 0.1 * jax.random.normal(ckey, (1, BATCH, HID), jnp.float32)

    ref_logits, ref_h, ref_c = _reference_step(tgt_token, hidden, cell, params)

    # Path 1: default byte-sized heuristic -> whole W_out resident (grid of 1).
    step_resident = jax.jit(lstm_decoder_step)
    logits, h_new, c_new = step_resident(tgt_token, hidden, cell, params)
    jax.block_until_ready((logits, h_new, c_new))
    assert logits.shape == (BATCH, VOCAB)
    assert h_new.shape == (1, BATCH, HID) and c_new.shape == (1, BATCH, HID)
    assert jnp.allclose(logits, ref_logits, atol=2e-3, rtol=2e-3)
    assert jnp.allclose(h_new, ref_h, atol=2e-3, rtol=2e-3)
    assert jnp.allclose(c_new, ref_c, atol=2e-3, rtol=2e-3)

    # Path 2: force the streamed projection (exercises the "parallel" V grid +
    # Buffered(3) pipeline). Production tile sizes come from the byte-based
    # heuristic; this small tile only exercises the code path at toy shapes.
    step_tiled = jax.jit(functools.partial(lstm_decoder_step, tile_v=512))
    logits_t, h_t, c_t = step_tiled(tgt_token, hidden, cell, params)
    jax.block_until_ready((logits_t, h_t, c_t))
    assert jnp.allclose(logits_t, ref_logits, atol=2e-3, rtol=2e-3)
    assert jnp.allclose(h_t, ref_h, atol=2e-3, rtol=2e-3)
    assert jnp.allclose(c_t, ref_c, atol=2e-3, rtol=2e-3)

    print("KERNEL_OK")
</pallas_src>

<mosaic_0001>
module attributes {stable_mosaic.version = 11 : i64} {
  func.func @_proj_kernel(%arg0: memref<8x128xbf16, #tpu.memory_space<vmem>>, %arg1: memref<128x2048xbf16, #tpu.memory_space<vmem>>, %arg2: memref<1x2048xf32, #tpu.memory_space<vmem>>, %arg3: memref<8x2048xf32, #tpu.memory_space<vmem>>) attributes {dimension_semantics = [], scalar_prefetch = 0 : i64, scratch_operands = 0 : i64, tpu.core_type = #tpu.core_type<tc>} {
    %c0 = arith.constant 0 : index
    %c0_0 = arith.constant 0 : index
    %0 = vector.load %arg0[%c0, %c0_0] : memref<8x128xbf16, #tpu.memory_space<vmem>>, vector<8x128xbf16>
    %c0_1 = arith.constant 0 : index
    %c0_2 = arith.constant 0 : index
    %1 = vector.load %arg1[%c0_1, %c0_2] : memref<128x2048xbf16, #tpu.memory_space<vmem>>, vector<128x2048xbf16>
    %cst = arith.constant dense<0.000000e+00> : vector<8x2048xf32>
    %2 = tpu.matmul %0, %1, %cst {dimension_numbers = #tpu.dot_dimension_numbers<[1], [0], [0], [1], [0, 0, 1, 1], [], []>} : vector<8x128xbf16>, vector<128x2048xbf16>, vector<8x2048xf32> -> vector<8x2048xf32>
    %c0_3 = arith.constant 0 : index
    %c0_4 = arith.constant 0 : index
    %3 = vector.load %arg2[%c0_3, %c0_4] : memref<1x2048xf32, #tpu.memory_space<vmem>>, vector<1x2048xf32>
    %4 = vector.broadcast %3 : vector<1x2048xf32> to vector<8x2048xf32>
    %5 = arith.addf %2, %4 : vector<8x2048xf32>
    %c0_5 = arith.constant 0 : index
    %c0_6 = arith.constant 0 : index
    %6 = vector.load %arg3[%c0_5, %c0_6] : memref<8x2048xf32, #tpu.memory_space<vmem>>, vector<8x2048xf32>
    tpu.vector_store %arg3[%c0_5, %c0_6], %5 {strides = array<i32>} : memref<8x2048xf32, #tpu.memory_space<vmem>>, vector<8x2048xf32>,
    return
  }
}

module attributes {stable_mosaic.version = 11 : i64} {
  func.func @_lstm_cell_kernel(%arg0: memref<8x256xbf16, #tpu.memory_space<vmem>>, %arg1: memref<8x128xf32, #tpu.memory_space<vmem>>, %arg2: memref<256x512xbf16, #tpu.memory_space<vmem>>, %arg3: memref<1x512xf32, #tpu.memory_space<vmem>>, %arg4: memref<8x128xf32, #tpu.memory_space<vmem>>, %arg5: memref<8x128xf32, #tpu.memory_space<vmem>>, %arg6: memref<8x128xbf16, #tpu.memory_space<vmem>>) attributes {dimension_semantics = [], scalar_prefetch = 0 : i64, scratch_operands = 0 : i64, tpu.core_type = #tpu.core_type<tc>} {
    %c0 = arith.constant 0 : index
    %c0_0 = arith.constant 0 : index
    %0 = vector.load %arg0[%c0, %c0_0] : memref<8x256xbf16, #tpu.memory_space<vmem>>, vector<8x256xbf16>
    %c0_1 = arith.constant 0 : index
    %c0_2 = arith.constant 0 : index
    %1 = vector.load %arg2[%c0_1, %c0_2] : memref<256x512xbf16, #tpu.memory_space<vmem>>, vector<256x512xbf16>
    %cst = arith.constant dense<0.000000e+00> : vector<8x512xf32>
    %2 = tpu.matmul %0, %1, %cst {dimension_numbers = #tpu.dot_dimension_numbers<[1], [0], [0], [1], [0, 0, 1, 1], [], []>} : vector<8x256xbf16>, vector<256x512xbf16>, vector<8x512xf32> -> vector<8x512xf32>
    %c0_3 = arith.constant 0 : index
    %c0_4 = arith.constant 0 : index
    %3 = vector.load %arg3[%c0_3, %c0_4] : memref<1x512xf32, #tpu.memory_space<vmem>>, vector<1x512xf32>
    %4 = vector.broadcast %3 : vector<1x512xf32> to vector<8x512xf32>
    %5 = arith.addf %2, %4 : vector<8x512xf32>
    %6 = vector.extract_strided_slice %5 {offsets = [0, 0], sizes = [8, 128], strides = [1, 1]} : vector<8x512xf32> to vector<8x128xf32>
    %7 = arith.negf %6 : vector<8x128xf32>
    %8 = math.exp %7 : vector<8x128xf32>
    %cst_5 = arith.constant 1.000000e+00 : f32
    %9 = vector.broadcast %cst_5 : f32 to vector<8x128xf32>
    %10 = arith.addf %9, %8 : vector<8x128xf32>
    %11 = arith.divf %9, %10 : vector<8x128xf32>
    %12 = vector.extract_strided_slice %5 {offsets = [0, 128], sizes = [8, 128], strides = [1, 1]} : vector<8x512xf32> to vector<8x128xf32>
    %13 = arith.negf %12 : vector<8x128xf32>
    %14 = math.exp %13 : vector<8x128xf32>
    %cst_6 = arith.constant 1.000000e+00 : f32
    %15 = vector.broadcast %cst_6 : f32 to vector<8x128xf32>
    %16 = arith.addf %15, %14 : vector<8x128xf32>
    %17 = arith.divf %15, %16 : vector<8x128xf32>
    %18 = vector.extract_strided_slice %5 {offsets = [0, 256], sizes = [8, 128], strides = [1, 1]} : vector<8x512xf32> to vector<8x128xf32>
    %19 = math.tanh %18 : vector<8x128xf32>
    %20 = vector.extract_strided_slice %5 {offsets = [0, 384], sizes = [8, 128], strides = [1, 1]} : vector<8x512xf32> to vector<8x128xf32>
    %21 = arith.negf %20 : vector<8x128xf32>
    %22 = math.exp %21 : vector<8x128xf32>
    %cst_7 = arith.constant 1.000000e+00 : f32
    %23 = vector.broadcast %cst_7 : f32 to vector<8x128xf32>
    %24 = arith.addf %23, %22 : vector<8x128xf32>
    %25 = arith.divf %23, %24 : vector<8x128xf32>
    %c0_8 = arith.constant 0 : index
    %c0_9 = arith.constant 0 : index
    %26 = vector.load %arg1[%c0_8, %c0_9] : memref<8x128xf32, #tpu.memory_space<vmem>>, vector<8x128xf32>
    %27 = arith.mulf %17, %26 : vector<8x128xf32>
    %28 = arith.mulf %11, %19 : vector<8x128xf32>
    %29 = arith.addf %27, %28 : vector<8x128xf32>
    %30 = math.tanh %29 : vector<8x128xf32>
    %31 = arith.mulf %25, %30 : vector<8x128xf32>
    %c0_10 = arith.constant 0 : index
    %c0_11 = arith.constant 0 : index
    %32 = vector.load %arg5[%c0_10, %c0_11] : memref<8x128xf32, #tpu.memory_space<vmem>>, vector<8x128xf32>
    tpu.vector_store %arg5[%c0_10, %c0_11], %29 {strides = array<i32>} : memref<8x128xf32, #tpu.memory_space<vmem>>, vector<8x128xf32>,
    %c0_12 = arith.constant 0 : index
    %c0_13 = arith.constant 0 : index
    %33 = vector.load %arg4[%c0_12, %c0_13] : memref<8x128xf32, #tpu.memory_space<vmem>>, vector<8x128xf32>
    tpu.vector_store %arg4[%c0_12, %c0_13], %31 {strides = array<i32>} : memref<8x128xf32, #tpu.memory_space<vmem>>, vector<8x128xf32>,
    %34 = arith.truncf %31 : vector<8x128xf32> to vector<8x128xbf16>
    %c0_14 = arith.constant 0 : index
    %c0_15 = arith.constant 0 : index
    %35 = vector.load %arg6[%c0_14, %c0_15] : memref<8x128xbf16, #tpu.memory_space<vmem>>, vector<8x128xbf16>
    tpu.vector_store %arg6[%c0_14, %c0_15], %34 {strides = array<i32>} : memref<8x128xbf16, #tpu.memory_space<vmem>>, vector<8x128xbf16>,
    return
  }
}

</mosaic_0001>

<llo_original>
// kernel: lstm_decoder_step.2
$region0: #{lstm_decoder_step.2}
  #allocation0 [shape = 'u32[]', space=smem, size = 0x4, offset = 0x4, fixed_abs, tag = 'smem constant byte address 0x4 - core index']
  #allocation1 [shape = 'u32[144,128]{1,0:T(1,128)}', space=vmem, size = 0x12000, scoped, tag = 'internal scratch']
  %s0 = inlined_call_operand.vmem [shape: bf16[8,256], index: 0, kind: input, shape index: {}]
  %s1 = inlined_call_operand.vmem [shape: f32[8,128], index: 1, kind: input, shape index: {}, may-alias: {1,5}]
  %s2 = inlined_call_operand.hbm [shape: bf16[256,512], index: 2, kind: input, shape index: {}]
  %s3 = inlined_call_operand.vmem [shape: f32[1,512], index: 3, kind: input, shape index: {}]
  %s4 = inlined_call_operand.hbm [shape: f32[8,128], index: 4, kind: output, shape index: {0}]
  %s5 = inlined_call_operand.vmem [shape: f32[8,128], index: 5, kind: output, shape index: {1}, may-alias: {1,5}]
  %s6 = inlined_call_operand.vmem [shape: bf16[8,128], index: 6, kind: output, shape index: {2}]
  %7 = xla_tuple %s4, %s5, %s6
  %s8 = sld [smem:[#allocation0]]
  $region46: #{lstm_decoder_step.2} parent=0
    _
  %s10 = ssub.s32 1, %s8
  %s11 = scalar_select 0, %s10, %s8
  $region1: #{lstm_decoder_step.2} parent=0
    #allocation2 [shape = 'u8[262144]{0}', space=vmem, size = 0x40000, scoped, tag = 'input window, operand 2, single buffered']
    #allocation3 [shape = 's32[1]{0}', space=sflag, size = 0x4, scoped, tag = 'scoped memory for lstm_decoder_step.2']
    #allocation4 [shape = 's32[1]{0}', space=sflag, size = 0x4, scoped, tag = 'scoped memory for lstm_decoder_step.2']
    #allocation5 [shape = 'u8[4096]{0}', space=vmem, size = 0x1000, scoped, tag = 'output window, operand 0, single buffered']
    %12 = vsyncpa [#allocation3], 0
    %13 = vsyncpa [#allocation4], 0
    // Predicated region
    $region2: #{lstm_decoder_step.2} parent=1 // pred_check
      _
    $region3: #{lstm_decoder_step.2} parent=1 // pred_check_branch
      %15 = sbr.rel (0) target = $region5
    $region4: #{lstm_decoder_step.2} parent=1 // pred_region
      _
    $region5: #{lstm_decoder_step.2} parent=1 // pred_fallthru
      _
    // Predicated region
    $region6: #{lstm_decoder_step.2} parent=1 // pred_check
      _
    $region7: #{lstm_decoder_step.2} parent=1 // pred_check_branch
      %17 = sbr.rel (0) target = $region9
    $region8: #{lstm_decoder_step.2} parent=1 // pred_region
      _
    $region9: #{lstm_decoder_step.2} parent=1 // pred_fallthru
      _
    // Predicated region
    $region10: #{lstm_decoder_step.2} parent=1 // pred_check
      _
    $region11: #{lstm_decoder_step.2} parent=1 // pred_check_branch
      %19 = sbr.rel (0) target = $region13
    $region12: #{lstm_decoder_step.2} parent=1 // pred_region
      %s21 = ssub.s32 8192, 8192
      %22 = vsyncadd [#allocation3], %s21
      %s23 = sshll.u32 [#allocation2], 4
      %s24 = int_to_ptr.vmem [resolvable:$true] %s23
      %29 = dma.hbm_to_vmem [thread:$0]  %s2, 8192, %s24, [#allocation3], 256, 256, 16
    $region13: #{lstm_decoder_step.2} parent=1 // pred_fallthru
      _
    // Predicated region
    $region14: #{lstm_decoder_step.2} parent=1 // pred_check
      _
    $region15: #{lstm_decoder_step.2} parent=1 // pred_check_branch
      %31 = sbr.rel (0) target = $region17
    $region16: #{lstm_decoder_step.2} parent=1 // pred_region
      _
    $region17: #{lstm_decoder_step.2} parent=1 // pred_fallthru
      _
    // Predicated region
    $region18: #{lstm_decoder_step.2} parent=1 // pred_check
      _
    $region19: #{lstm_decoder_step.2} parent=1 // pred_check_branch
      %33 = sbr.rel (0) target = $region21
    $region20: #{lstm_decoder_step.2} parent=1 // pred_region
      %34 = dma.done [#allocation3], 8192
    $region21: #{lstm_decoder_step.2} parent=1 // pred_fallthru
      _
    %v35 = vld [vmem:[%s0] sm:$0xff]
    %v36 = vld [vmem:[#allocation2] sm:$0xff]
    %v37 = vld [vmem:[#allocation2 + $0x8] sm:$0xff]
    %v38 = vld [vmem:[#allocation2 + $0x10] sm:$0xff]
    %v39 = vld [vmem:[#allocation2 + $0x18] sm:$0xff]
    %v40 = vld [vmem:[#allocation2 + $0x20] sm:$0xff]
    %v41 = vld [vmem:[#allocation2 + $0x28] sm:$0xff]
    %v42 = vld [vmem:[#allocation2 + $0x30] sm:$0xff]
    %v43 = vld [vmem:[#allocation2 + $0x38] sm:$0xff]
    %v44 = vld [vmem:[#allocation2 + $0x40] sm:$0xff]
    %v45 = vld [vmem:[#allocation2 + $0x48] sm:$0xff]
    %v46 = vld [vmem:[#allocation2 + $0x50] sm:$0xff]
    %v47 = vld [vmem:[#allocation2 + $0x58] sm:$0xff]
    %v48 = vld [vmem:[#allocation2 + $0x60] sm:$0xff]
    %v49 = vld [vmem:[#allocation2 + $0x68] sm:$0xff]
    %v50 = vld [vmem:[#allocation2 + $0x70] sm:$0xff]
    %v51 = vld [vmem:[#allocation2 + $0x78] sm:$0xff]
    %v52 = vld [vmem:[#allocation2 + $0x80] sm:$0xff]
    %v53 = vld [vmem:[#allocation2 + $0x88] sm:$0xff]
    %v54 = vld [vmem:[#allocation2 + $0x90] sm:$0xff]
    %v55 = vld [vmem:[#allocation2 + $0x98] sm:$0xff]
    %v56 = vld [vmem:[#allocation2 + $0xa0] sm:$0xff]
    %v57 = vld [vmem:[#allocation2 + $0xa8] sm:$0xff]
    %v58 = vld [vmem:[#allocation2 + $0xb0] sm:$0xff]
    %v59 = vld [vmem:[#allocation2 + $0xb8] sm:$0xff]
    %v60 = vld [vmem:[#allocation2 + $0xc0] sm:$0xff]
    %v61 = vld [vmem:[#allocation2 + $0xc8] sm:$0xff]
    %v62 = vld [vmem:[#allocation2 + $0xd0] sm:$0xff]
    %v63 = vld [vmem:[#allocation2 + $0xd8] sm:$0xff]
    %v64 = vld [vmem:[#allocation2 + $0xe0] sm:$0xff]
    %v65 = vld [vmem:[#allocation2 + $0xe8] sm:$0xff]
    %v66 = vld [vmem:[#allocation2 + $0xf0] sm:$0xff]
    %v67 = vld [vmem:[#allocation2 + $0xf8] sm:$0xff]
    %v68 = vld [vmem:[#allocation2 + $0x100] sm:$0xff]
    %v69 = vld [vmem:[#allocation2 + $0x108] sm:$0xff]
    %v70 = vld [vmem:[#allocation2 + $0x110] sm:$0xff]
    %v71 = vld [vmem:[#allocation2 + $0x118] sm:$0xff]
    %v72 = vld [vmem:[#allocation2 + $0x120] sm:$0xff]
    %v73 = vld [vmem:[#allocation2 + $0x128] sm:$0xff]
    %v74 = vld [vmem:[#allocation2 + $0x130] sm:$0xff]
    %v75 = vld [vmem:[#allocation2 + $0x138] sm:$0xff]
    %v76 = vld [vmem:[#allocation2 + $0x140] sm:$0xff]
    %v77 = vld [vmem:[#allocation2 + $0x148] sm:$0xff]
    %v78 = vld [vmem:[#allocation2 + $0x150] sm:$0xff]
    %v79 = vld [vmem:[#allocation2 + $0x158] sm:$0xff]
    %v80 = vld [vmem:[#allocation2 + $0x160] sm:$0xff]
    %v81 = vld [vmem:[#allocation2 + $0x168] sm:$0xff]
    %v82 = vld [vmem:[#allocation2 + $0x170] sm:$0xff]
    %v83 = vld [vmem:[#allocation2 + $0x178] sm:$0xff]
    %v84 = vld [vmem:[#allocation2 + $0x180] sm:$0xff]
    %v85 = vld [vmem:[#allocation2 + $0x188] sm:$0xff]
    %v86 = vld [vmem:[#allocation2 + $0x190] sm:$0xff]
    %v87 = vld [vmem:[#allocation2 + $0x198] sm:$0xff]
    %v88 = vld [vmem:[#allocation2 + $0x1a0] sm:$0xff]
    %v89 = vld [vmem:[#allocation2 + $0x1a8] sm:$0xff]
    %v90 = vld [vmem:[#allocation2 + $0x1b0] sm:$0xff]
    %v91 = vld [vmem:[#allocation2 + $0x1b8] sm:$0xff]
    %v92 = vld [vmem:[#allocation2 + $0x1c0] sm:$0xff]
    %v93 = vld [vmem:[#allocation2 + $0x1c8] sm:$0xff]
    %v94 = vld [vmem:[#allocation2 + $0x1d0] sm:$0xff]
    %v95 = vld [vmem:[#allocation2 + $0x1d8] sm:$0xff]
    %v96 = vld [vmem:[#allocation2 + $0x1e0] sm:$0xff]
    %v97 = vld [vmem:[#allocation2 + $0x1e8] sm:$0xff]
    %v98 = vld [vmem:[#allocation2 + $0x1f0] sm:$0xff]
    %v99 = vld [vmem:[#allocation2 + $0x1f8] sm:$0xff]
    %v100 = vld [vmem:[%s3] sm:$0xf]
    %v102 = vlaneseq
    %v103 = vshrl.u32 %v102, 7
    %v104 = vsub.s32 0, %v103
    %v105 = vrot.slane %v100, %v104
    %v106 = vlaneseq
    %v107 = vshrl.u32 %v106, 7
    %v108 = vsub.s32 1, %v107
    %v109 = vrot.slane %v100, %v108
    %v110 = vlaneseq
    %v111 = vshrl.u32 %v110, 7
    %v112 = vsub.s32 2, %v111
    %v113 = vrot.slane %v100, %v112
    %v114 = vlaneseq
    %v115 = vshrl.u32 %v114, 7
    %v116 = vsub.s32 3, %v115
    %v117 = vrot.slane %v100, %v116
    %v123 = vunpack.c.l.b16 %v35
    %v124 = vunpack.c.h.b16 %v35
    %v125 = vpack.c.b16 %v123, %v123
    %v126 = vpack.c.b16 %v124, %v124
    %v193 = vunpack.c.l.b16 %v36
    %v194 = vunpack.c.h.b16 %v36
    %v195 = vunpack.c.l.b16 %v37
    %v196 = vunpack.c.h.b16 %v37
    %v197 = vunpack.c.l.b16 %v38
    %v198 = vunpack.c.h.b16 %v38
    %v199 = vunpack.c.l.b16 %v39
    %v200 = vunpack.c.h.b16 %v39
    %v201 = vunpack.c.l.b16 %v40
    %v202 = vunpack.c.h.b16 %v40
    %v203 = vunpack.c.l.b16 %v41
    %v204 = vunpack.c.h.b16 %v41
    %v205 = vunpack.c.l.b16 %v42
    %v206 = vunpack.c.h.b16 %v42
    %v207 = vunpack.c.l.b16 %v43
    %v208 = vunpack.c.h.b16 %v43
    %v209 = vunpack.c.l.b16 %v44
    %v210 = vunpack.c.h.b16 %v44
    %v211 = vunpack.c.l.b16 %v45
    %v212 = vunpack.c.h.b16 %v45
    %v213 = vunpack.c.l.b16 %v46
    %v214 = vunpack.c.h.b16 %v46
    %v215 = vunpack.c.l.b16 %v47
    %v216 = vunpack.c.h.b16 %v47
    %v217 = vunpack.c.l.b16 %v48
    %v218 = vunpack.c.h.b16 %v48
    %v219 = vunpack.c.l.b16 %v49
    %v220 = vunpack.c.h.b16 %v49
    %v221 = vunpack.c.l.b16 %v50
    %v222 = vunpack.c.h.b16 %v50
    %v223 = vunpack.c.l.b16 %v51
    %v224 = vunpack.c.h.b16 %v51
    %v225 = vunpack.c.l.b16 %v52
    %v226 = vunpack.c.h.b16 %v52
    %v227 = vunpack.c.l.b16 %v53
    %v228 = vunpack.c.h.b16 %v53
    %v229 = vunpack.c.l.b16 %v54
    %v230 = vunpack.c.h.b16 %v54
    %v231 = vunpack.c.l.b16 %v55
    %v232 = vunpack.c.h.b16 %v55
    %v233 = vunpack.c.l.b16 %v56
    %v234 = vunpack.c.h.b16 %v56
    %v235 = vunpack.c.l.b16 %v57
    %v236 = vunpack.c.h.b16 %v57
    %v237 = vunpack.c.l.b16 %v58
    %v238 = vunpack.c.h.b16 %v58
    %v239 = vunpack.c.l.b16 %v59
    %v240 = vunpack.c.h.b16 %v59
    %v241 = vunpack.c.l.b16 %v60
    %v242 = vunpack.c.h.b16 %v60
    %v243 = vunpack.c.l.b16 %v61
    %v244 = vunpack.c.h.b16 %v61
    %v245 = vunpack.c.l.b16 %v62
    %v246 = vunpack.c.h.b16 %v62
    %v247 = vunpack.c.l.b16 %v63
    %v248 = vunpack.c.h.b16 %v63
    %v249 = vunpack.c.l.b16 %v64
    %v250 = vunpack.c.h.b16 %v64
    %v251 = vunpack.c.l.b16 %v65
    %v252 = vunpack.c.h.b16 %v65
    %v253 = vunpack.c.l.b16 %v66
    %v254 = vunpack.c.h.b16 %v66
    %v255 = vunpack.c.l.b16 %v67
    %v256 = vunpack.c.h.b16 %v67
    %v257 = vunpack.c.l.b16 %v68
    %v258 = vunpack.c.h.b16 %v68
    %v259 = vunpack.c.l.b16 %v69
    %v260 = vunpack.c.h.b16 %v69
    %v261 = vunpack.c.l.b16 %v70
    %v262 = vunpack.c.h.b16 %v70
    %v263 = vunpack.c.l.b16 %v71
    %v264 = vunpack.c.h.b16 %v71
    %v265 = vunpack.c.l.b16 %v72
    %v266 = vunpack.c.h.b16 %v72
    %v267 = vunpack.c.l.b16 %v73
    %v268 = vunpack.c.h.b16 %v73
    %v269 = vunpack.c.l.b16 %v74
    %v270 = vunpack.c.h.b16 %v74
    %v271 = vunpack.c.l.b16 %v75
    %v272 = vunpack.c.h.b16 %v75
    %v273 = vunpack.c.l.b16 %v76
    %v274 = vunpack.c.h.b16 %v76
    %v275 = vunpack.c.l.b16 %v77
    %v276 = vunpack.c.h.b16 %v77
    %v277 = vunpack.c.l.b16 %v78
    %v278 = vunpack.c.h.b16 %v78
    %v279 = vunpack.c.l.b16 %v79
    %v280 = vunpack.c.h.b16 %v79
    %v281 = vunpack.c.l.b16 %v80
    %v282 = vunpack.c.h.b16 %v80
    %v283 = vunpack.c.l.b16 %v81
    %v284 = vunpack.c.h.b16 %v81
    %v285 = vunpack.c.l.b16 %v82
    %v286 = vunpack.c.h.b16 %v82
    %v287 = vunpack.c.l.b16 %v83
    %v288 = vunpack.c.h.b16 %v83
    %v289 = vunpack.c.l.b16 %v84
    %v290 = vunpack.c.h.b16 %v84
    %v291 = vunpack.c.l.b16 %v85
    %v292 = vunpack.c.h.b16 %v85
    %v293 = vunpack.c.l.b16 %v86
    %v294 = vunpack.c.h.b16 %v86
    %v295 = vunpack.c.l.b16 %v87
    %v296 = vunpack.c.h.b16 %v87
    %v297 = vunpack.c.l.b16 %v88
    %v298 = vunpack.c.h.b16 %v88
    %v299 = vunpack.c.l.b16 %v89
    %v300 = vunpack.c.h.b16 %v89
    %v301 = vunpack.c.l.b16 %v90
    %v302 = vunpack.c.h.b16 %v90
    %v303 = vunpack.c.l.b16 %v91
    %v304 = vunpack.c.h.b16 %v91
    %v305 = vunpack.c.l.b16 %v92
    %v306 = vunpack.c.h.b16 %v92
    %v307 = vunpack.c.l.b16 %v93
    %v308 = vunpack.c.h.b16 %v93
    %v309 = vunpack.c.l.b16 %v94
    %v310 = vunpack.c.h.b16 %v94
    %v311 = vunpack.c.l.b16 %v95
    %v312 = vunpack.c.h.b16 %v95
    %v313 = vunpack.c.l.b16 %v96
    %v314 = vunpack.c.h.b16 %v96
    %v315 = vunpack.c.l.b16 %v97
    %v316 = vunpack.c.h.b16 %v97
    %v317 = vunpack.c.l.b16 %v98
    %v318 = vunpack.c.h.b16 %v98
    %v319 = vunpack.c.l.b16 %v99
    %v320 = vunpack.c.h.b16 %v99
    %v321 = vpack.c.b16 %v197, %v193
    %v322 = vpack.c.b16 %v198, %v194
    %v323 = vpack.c.b16 %v199, %v195
    %v324 = vpack.c.b16 %v200, %v196
    %v325 = vpack.c.b16 %v205, %v201
    %v326 = vpack.c.b16 %v206, %v202
    %v327 = vpack.c.b16 %v207, %v203
    %v328 = vpack.c.b16 %v208, %v204
    %v329 = vpack.c.b16 %v213, %v209
    %v330 = vpack.c.b16 %v214, %v210
    %v331 = vpack.c.b16 %v215, %v211
    %v332 = vpack.c.b16 %v216, %v212
    %v333 = vpack.c.b16 %v221, %v217
    %v334 = vpack.c.b16 %v222, %v218
    %v335 = vpack.c.b16 %v223, %v219
    %v336 = vpack.c.b16 %v224, %v220
    %v337 = vpack.c.b16 %v229, %v225
    %v338 = vpack.c.b16 %v230, %v226
    %v339 = vpack.c.b16 %v231, %v227
    %v340 = vpack.c.b16 %v232, %v228
    %v341 = vpack.c.b16 %v237, %v233
    %v342 = vpack.c.b16 %v238, %v234
    %v343 = vpack.c.b16 %v239, %v235
    %v344 = vpack.c.b16 %v240, %v236
    %v345 = vpack.c.b16 %v245, %v241
    %v346 = vpack.c.b16 %v246, %v242
    %v347 = vpack.c.b16 %v247, %v243
    %v348 = vpack.c.b16 %v248, %v244
    %v349 = vpack.c.b16 %v253, %v249
    %v350 = vpack.c.b16 %v254, %v250
    %v351 = vpack.c.b16 %v255, %v251
    %v352 = vpack.c.b16 %v256, %v252
    %v353 = vpack.c.b16 %v261, %v257
    %v354 = vpack.c.b16 %v262, %v258
    %v355 = vpack.c.b16 %v263, %v259
    %v356 = vpack.c.b16 %v264, %v260
    %v357 = vpack.c.b16 %v269, %v265
    %v358 = vpack.c.b16 %v270, %v266
    %v359 = vpack.c.b16 %v271, %v267
    %v360 = vpack.c.b16 %v272, %v268
    %v361 = vpack.c.b16 %v277, %v273
    %v362 = vpack.c.b16 %v278, %v274
    %v363 = vpack.c.b16 %v279, %v275
    %v364 = vpack.c.b16 %v280, %v276
    %v365 = vpack.c.b16 %v285, %v281
    %v366 = vpack.c.b16 %v286, %v282
    %v367 = vpack.c.b16 %v287, %v283
    %v368 = vpack.c.b16 %v288, %v284
    %v369 = vpack.c.b16 %v293, %v289
    %v370 = vpack.c.b16 %v294, %v290
    %v371 = vpack.c.b16 %v295, %v291
    %v372 = vpack.c.b16 %v296, %v292
    %v373 = vpack.c.b16 %v301, %v297
    %v374 = vpack.c.b16 %v302, %v298
    %v375 = vpack.c.b16 %v303, %v299
    %v376 = vpack.c.b16 %v304, %v300
    %v377 = vpack.c.b16 %v309, %v305
    %v378 = vpack.c.b16 %v310, %v306
    %v379 = vpack.c.b16 %v311, %v307
    %v380 = vpack.c.b16 %v312, %v308
    %v381 = vpack.c.b16 %v317, %v313
    %v382 = vpack.c.b16 %v318, %v314
    %v383 = vpack.c.b16 %v319, %v315
    %v384 = vpack.c.b16 %v320, %v316
    %449 = vmatprep.subr.bf16.mxu0 %v322
    %450 = vmatpush1.bf16.msra.mxu0 %v321
    %451 = vmatprep.subr.bf16.mxu0 %v326
    %452 = vmatpush1.bf16.msra.mxu0 %v325
    %453 = vmatprep.subr.bf16.mxu0 %v330
    %454 = vmatpush1.bf16.msra.mxu0 %v329
    %455 = vmatprep.subr.bf16.mxu0 %v334
    %456 = vmatpush1.bf16.msra.mxu0 %v333
    %457 = vmatprep.subr.bf16.mxu0 %v338
    %458 = vmatpush1.bf16.msra.mxu0 %v337
    %459 = vmatprep.subr.bf16.mxu0 %v342
    %460 = vmatpush1.bf16.msra.mxu0 %v341
    %461 = vmatprep.subr.bf16.mxu0 %v346
    %462 = vmatpush1.bf16.msra.mxu0 %v345
    %463 = vmatprep.subr.bf16.mxu0 %v350
    %464 = vmatpush1.bf16.msra.mxu0 %v349
    %465 = vmatprep.subr.bf16.mxu0 %v354
    %466 = vmatpush1.bf16.msra.mxu0 %v353
    %467 = vmatprep.subr.bf16.mxu0 %v358
    %468 = vmatpush1.bf16.msra.mxu0 %v357
    %469 = vmatprep.subr.bf16.mxu0 %v362
    %470 = vmatpush1.bf16.msra.mxu0 %v361
    %471 = vmatprep.subr.bf16.mxu0 %v366
    %472 = vmatpush1.bf16.msra.mxu0 %v365
    %473 = vmatprep.subr.bf16.mxu0 %v370
    %474 = vmatpush1.bf16.msra.mxu0 %v369
    %475 = vmatprep.subr.bf16.mxu0 %v374
    %476 = vmatpush1.bf16.msra.mxu0 %v373
    %477 = vmatprep.subr.bf16.mxu0 %v378
    %478 = vmatpush1.bf16.msra.mxu0 %v377
    %479 = vmatprep.subr.bf16.mxu0 %v382
    %480 = vmatpush1.bf16.msra.mxu0 %v381
    %481 = vmatprep.mubr.bf16.mxu0 %v126
    %482 = vmatmul.mubr.bf16.gmra.mrb[0].mxu0 %v125
    %v483 = vpop.f32.mrb[0].mxu0
    %v484 = vadd.f32 %v105, %v483
    %v485 = vpop.f32.mrb[0].mxu0
    %v486 = vadd.f32 %v109, %v485
    %v487 = vpop.f32.mrb[0].mxu0
    %v488 = vpop.f32.mrb[0].mxu0
    %489 = vdwg.mxu0
    %490 = vmatprep.subr.bf16.mxu0 %v324
    %491 = vmatpush1.bf16.msra.mxu0 %v323
    %492 = vmatprep.subr.bf16.mxu0 %v328
    %493 = vmatpush1.bf16.msra.mxu0 %v327
    %494 = vmatprep.subr.bf16.mxu0 %v332
    %495 = vmatpush1.bf16.msra.mxu0 %v331
    %496 = vmatprep.subr.bf16.mxu0 %v336
    %497 = vmatpush1.bf16.msra.mxu0 %v335
    %498 = vmatprep.subr.bf16.mxu0 %v340
    %499 = vmatpush1.bf16.msra.mxu0 %v339
    %500 = vmatprep.subr.bf16.mxu0 %v344
    %501 = vmatpush1.bf16.msra.mxu0 %v343
    %502 = vmatprep.subr.bf16.mxu0 %v348
    %503 = vmatpush1.bf16.msra.mxu0 %v347
    %504 = vmatprep.subr.bf16.mxu0 %v352
    %505 = vmatpush1.bf16.msra.mxu0 %v351
    %506 = vmatprep.subr.bf16.mxu0 %v356
    %507 = vmatpush1.bf16.msra.mxu0 %v355
    %508 = vmatprep.subr.bf16.mxu0 %v360
    %509 = vmatpush1.bf16.msra.mxu0 %v359
    %510 = vmatprep.subr.bf16.mxu0 %v364
    %511 = vmatpush1.bf16.msra.mxu0 %v363
    %512 = vmatprep.subr.bf16.mxu0 %v368
    %513 = vmatpush1.bf16.msra.mxu0 %v367
    %514 = vmatprep.subr.bf16.mxu0 %v372
    %515 = vmatpush1.bf16.msra.mxu0 %v371
    %516 = vmatprep.subr.bf16.mxu0 %v376
    %517 = vmatpush1.bf16.msra.mxu0 %v375
    %518 = vmatprep.subr.bf16.mxu0 %v380
    %519 = vmatpush1.bf16.msra.mxu0 %v379
    %520 = vmatprep.subr.bf16.mxu0 %v384
    %521 = vmatpush1.bf16.msra.mxu0 %v383
    %522 = vmatprep.mubr.bf16.mxu0 %v126
    %523 = vmatmul.mubr.bf16.gmra.mrb[0].mxu0 %v125
    %v524 = vpop.f32.mrb[0].mxu0
    %v525 = vadd.f32 %v113, %v524
    %v526 = vpop.f32.mrb[0].mxu0
    %v527 = vadd.f32 %v117, %v526
    %v528 = vpop.f32.mrb[0].mxu0
    %v529 = vpop.f32.mrb[0].mxu0
    %530 = vdwg.mxu0
    %v531 = vxor.u32 %v484, 2147483648
    %v532 = vmul.f32 %v531, 1.442695
    %v533 = vpow.pop %v532
    %v534 = vadd.f32 %v533, 1.0
    %v535 = vrcp.pop %v534
    %v536 = vmul.f32 1.0, %v535
    %v537 = vxor.u32 %v486, 2147483648
    %v538 = vmul.f32 %v537, 1.442695
    %v539 = vpow.pop %v538
    %v540 = vadd.f32 %v539, 1.0
    %v541 = vrcp.pop %v540
    %v542 = vmul.f32 1.0, %v541
    %v543 = vtanh.pop %v525
    %v544 = vxor.u32 %v527, 2147483648
    %v545 = vmul.f32 %v544, 1.442695
    %v546 = vpow.pop %v545
    %v547 = vadd.f32 %v546, 1.0
    %v548 = vrcp.pop %v547
    %v549 = vmul.f32 1.0, %v548
    %v550 = vld [vmem:[%s1] sm:$0xff]
    %v551 = vmul.f32 %v542, %v550
    %v552 = vmul.f32 %v536, %v543
    %v553 = vadd.f32 %v551, %v552
    %v554 = vtanh.pop %v553
    %v555 = vmul.f32 %v549, %v554
    %556 = vst [vmem:[%s5] sm:$0xff] %v553
    %557 = vst [vmem:[#allocation5] sm:$0xff] %v555
    %v558 = vpack.c.bf16 %v555, %v555
    %559 = vst [vmem:[%s6] sm:$0xf] %v558
    // Predicated region
    $region22: #{lstm_decoder_step.2} parent=1 // pred_check
      _
    $region23: #{lstm_decoder_step.2} parent=1 // pred_check_branch
      %561 = sbr.rel (0) target = $region25
    $region24: #{lstm_decoder_step.2} parent=1 // pred_region
      %s563 = ssub.s32 128, 128
      %564 = vsyncadd [#allocation4], %s563
      %s566 = sshll.u32 [#allocation5], 4
      %s567 = int_to_ptr.vmem [resolvable:$true] %s566
      %569 = dma.vmem_to_hbm [thread:$0]  %s567, 128, %s4, [#allocation4]
    $region25: #{lstm_decoder_step.2} parent=1 // pred_fallthru
      _
    // Predicated region
    $region26: #{lstm_decoder_step.2} parent=1 // pred_check
      _
    $region27: #{lstm_decoder_step.2} parent=1 // pred_check_branch
      %571 = sbr.rel (0) target = $region29
    $region28: #{lstm_decoder_step.2} parent=1 // pred_region
      _
    $region29: #{lstm_decoder_step.2} parent=1 // pred_fallthru
      _
    // Predicated region
    $region30: #{lstm_decoder_step.2} parent=1 // pred_check
      _
    $region31: #{lstm_decoder_step.2} parent=1 // pred_check_branch
      %573 = sbr.rel (0) target = $region33
    $region32: #{lstm_decoder_step.2} parent=1 // pred_region
      _
    $region33: #{lstm_decoder_step.2} parent=1 // pred_fallthru
      _
    // Predicated region
    $region34: #{lstm_decoder_step.2} parent=1 // pred_check
      _
    $region35: #{lstm_decoder_step.2} parent=1 // pred_check_branch
      %575 = sbr.rel (0) target = $region37
    $region36: #{lstm_decoder_step.2} parent=1 // pred_region
      %576 = dma.done [#allocation4], 128
    $region37: #{lstm_decoder_step.2} parent=1 // pred_fallthru
      _
    // Predicated region
    $region38: #{lstm_decoder_step.2} parent=1 // pred_check
      _
    $region39: #{lstm_decoder_step.2} parent=1 // pred_check_branch
      %578 = sbr.rel (0) target = $region41
    $region40: #{lstm_decoder_step.2} parent=1 // pred_region
      _
    $region41: #{lstm_decoder_step.2} parent=1 // pred_fallthru
      _
    // Predicated region
    $region42: #{lstm_decoder_step.2} parent=1 // pred_check
      _
    $region43: #{lstm_decoder_step.2} parent=1 // pred_check_branch
      %580 = sbr.rel (0) target = $region45
    $region44: #{lstm_decoder_step.2} parent=1 // pred_region
      _
    $region45: #{lstm_decoder_step.2} parent=1 // pred_fallthru
      _
    %581 = vsyncpa [#allocation3], 1
    %582 = vsyncpa [#allocation4], 1

// kernel: lstm_decoder_step.3
$region0: #{lstm_decoder_step.3}
  #allocation0 [shape = 'u32[]', space=smem, size = 0x4, offset = 0x4, fixed_abs, tag = 'smem constant byte address 0x4 - core index']
  #allocation1 [shape = 'u32[144,128]{1,0:T(1,128)}', space=vmem, size = 0x12000, scoped, tag = 'internal scratch']
  %s0 = inlined_call_operand.vmem [shape: bf16[8,128], index: 0, kind: input, shape index: {}]
  %s1 = inlined_call_operand.hbm [shape: bf16[128,2048], index: 1, kind: input, shape index: {}]
  %s2 = inlined_call_operand.vmem [shape: f32[1,2048], index: 2, kind: input, shape index: {}]
  %s3 = inlined_call_operand.hbm [shape: f32[8,2048], index: 3, kind: output, shape index: {}]
  %s4 = sld [smem:[#allocation0]]
  $region26: #{lstm_decoder_step.3} parent=0
    _
  %s6 = ssub.s32 1, %s4
  %s7 = scalar_select 0, %s6, %s4
  $region1: #{lstm_decoder_step.3} parent=0
    #allocation2 [shape = 'u8[524288]{0}', space=vmem, size = 0x80000, scoped, tag = 'input window, operand 1, single buffered']
    #allocation3 [shape = 's32[1]{0}', space=sflag, size = 0x4, scoped, tag = 'scoped memory for lstm_decoder_step.3']
    #allocation4 [shape = 's32[1]{0}', space=sflag, size = 0x4, scoped, tag = 'scoped memory for lstm_decoder_step.3']
    #allocation5 [shape = 'u8[65536]{0}', space=vmem, size = 0x10000, scoped, tag = 'output window, operand 0, single buffered']
    %8 = vsyncpa [#allocation3], 0
    %9 = vsyncpa [#allocation4], 0
    // Predicated region
    $region2: #{lstm_decoder_step.3} parent=1 // pred_check
      _
    $region3: #{lstm_decoder_step.3} parent=1 // pred_check_branch
      %11 = sbr.rel (0) target = $region5
    $region4: #{lstm_decoder_step.3} parent=1 // pred_region
      _
    $region5: #{lstm_decoder_step.3} parent=1 // pred_fallthru
      _
    // Predicated region
    $region6: #{lstm_decoder_step.3} parent=1 // pred_check
      _
    $region7: #{lstm_decoder_step.3} parent=1 // pred_check_branch
      %13 = sbr.rel (0) target = $region9
    $region8: #{lstm_decoder_step.3} parent=1 // pred_region
      %s15 = ssub.s32 16384, 16384
      %16 = vsyncadd [#allocation3], %s15
      %s17 = sshll.u32 [#allocation2], 4
      %s18 = int_to_ptr.vmem [resolvable:$true] %s17
      %23 = dma.hbm_to_vmem [thread:$0]  %s1, 16384, %s18, [#allocation3], 1024, 1024, 64
    $region9: #{lstm_decoder_step.3} parent=1 // pred_fallthru
      _
    // Predicated region
    $region10: #{lstm_decoder_step.3} parent=1 // pred_check
      _
    $region11: #{lstm_decoder_step.3} parent=1 // pred_check_branch
      %25 = sbr.rel (0) target = $region13
    $region12: #{lstm_decoder_step.3} parent=1 // pred_region
      _
    $region13: #{lstm_decoder_step.3} parent=1 // pred_fallthru
      _
    // Predicated region
    $region14: #{lstm_decoder_step.3} parent=1 // pred_check
      _
    $region15: #{lstm_decoder_step.3} parent=1 // pred_check_branch
      %27 = sbr.rel (0) target = $region17
    $region16: #{lstm_decoder_step.3} parent=1 // pred_region
      %28 = dma.done [#allocation3], 16384
    $region17: #{lstm_decoder_step.3} parent=1 // pred_fallthru
      _
    %v30 = vld [vmem:[%s0] sm:$0xf]
    %v31 = vld [vmem:[#allocation2] sm:$0xff]
    %v32 = vld [vmem:[#allocation2 + $0x8] sm:$0xff]
    %v33 = vld [vmem:[#allocation2 + $0x10] sm:$0xff]
    %v34 = vld [vmem:[#allocation2 + $0x18] sm:$0xff]
    %v35 = vld [vmem:[#allocation2 + $0x20] sm:$0xff]
    %v36 = vld [vmem:[#allocation2 + $0x28] sm:$0xff]
    %v37 = vld [vmem:[#allocation2 + $0x30] sm:$0xff]
    %v38 = vld [vmem:[#allocation2 + $0x38] sm:$0xff]
    %v39 = vld [vmem:[#allocation2 + $0x40] sm:$0xff]
    %v40 = vld [vmem:[#allocation2 + $0x48] sm:$0xff]
    %v41 = vld [vmem:[#allocation2 + $0x50] sm:$0xff]
    %v42 = vld [vmem:[#allocation2 + $0x58] sm:$0xff]
    %v43 = vld [vmem:[#allocation2 + $0x60] sm:$0xff]
    %v44 = vld [vmem:[#allocation2 + $0x68] sm:$0xff]
    %v45 = vld [vmem:[#allocation2 + $0x70] sm:$0xff]
    %v46 = vld [vmem:[#allocation2 + $0x78] sm:$0xff]
    %v47 = vld [vmem:[#allocation2 + $0x80] sm:$0xff]
    %v48 = vld [vmem:[#allocation2 + $0x88] sm:$0xff]
    %v49 = vld [vmem:[#allocation2 + $0x90] sm:$0xff]
    %v50 = vld [vmem:[#allocation2 + $0x98] sm:$0xff]
    %v51 = vld [vmem:[#allocation2 + $0xa0] sm:$0xff]
    %v52 = vld [vmem:[#allocation2 + $0xa8] sm:$0xff]
    %v53 = vld [vmem:[#allocation2 + $0xb0] sm:$0xff]
    %v54 = vld [vmem:[#allocation2 + $0xb8] sm:$0xff]
    %v55 = vld [vmem:[#allocation2 + $0xc0] sm:$0xff]
    %v56 = vld [vmem:[#allocation2 + $0xc8] sm:$0xff]
    %v57 = vld [vmem:[#allocation2 + $0xd0] sm:$0xff]
    %v58 = vld [vmem:[#allocation2 + $0xd8] sm:$0xff]
    %v59 = vld [vmem:[#allocation2 + $0xe0] sm:$0xff]
    %v60 = vld [vmem:[#allocation2 + $0xe8] sm:$0xff]
    %v61 = vld [vmem:[#allocation2 + $0xf0] sm:$0xff]
    %v62 = vld [vmem:[#allocation2 + $0xf8] sm:$0xff]
    %v63 = vld [vmem:[#allocation2 + $0x100] sm:$0xff]
    %v64 = vld [vmem:[#allocation2 + $0x108] sm:$0xff]
    %v65 = vld [vmem:[#allocation2 + $0x110] sm:$0xff]
    %v66 = vld [vmem:[#allocation2 + $0x118] sm:$0xff]
    %v67 = vld [vmem:[#allocation2 + $0x120] sm:$0xff]
    %v68 = vld [vmem:[#allocation2 + $0x128] sm:$0xff]
    %v69 = vld [vmem:[#allocation2 + $0x130] sm:$0xff]
    %v70 = vld [vmem:[#allocation2 + $0x138] sm:$0xff]
    %v71 = vld [vmem:[#allocation2 + $0x140] sm:$0xff]
    %v72 = vld [vmem:[#allocation2 + $0x148] sm:$0xff]
    %v73 = vld [vmem:[#allocation2 + $0x150] sm:$0xff]
    %v74 = vld [vmem:[#allocation2 + $0x158] sm:$0xff]
    %v75 = vld [vmem:[#allocation2 + $0x160] sm:$0xff]
    %v76 = vld [vmem:[#allocation2 + $0x168] sm:$0xff]
    %v77 = vld [vmem:[#allocation2 + $0x170] sm:$0xff]
    %v78 = vld [vmem:[#allocation2 + $0x178] sm:$0xff]
    %v79 = vld [vmem:[#allocation2 + $0x180] sm:$0xff]
    %v80 = vld [vmem:[#allocation2 + $0x188] sm:$0xff]
    %v81 = vld [vmem:[#allocation2 + $0x190] sm:$0xff]
    %v82 = vld [vmem:[#allocation2 + $0x198] sm:$0xff]
    %v83 = vld [vmem:[#allocation2 + $0x1a0] sm:$0xff]
    %v84 = vld [vmem:[#allocation2 + $0x1a8] sm:$0xff]
    %v85 = vld [vmem:[#allocation2 + $0x1b0] sm:$0xff]
    %v86 = vld [vmem:[#allocation2 + $0x1b8] sm:$0xff]
    %v87 = vld [vmem:[#allocation2 + $0x1c0] sm:$0xff]
    %v88 = vld [vmem:[#allocation2 + $0x1c8] sm:$0xff]
    %v89 = vld [vmem:[#allocation2 + $0x1d0] sm:$0xff]
    %v90 = vld [vmem:[#allocation2 + $0x1d8] sm:$0xff]
    %v91 = vld [vmem:[#allocation2 + $0x1e0] sm:$0xff]
    %v92 = vld [vmem:[#allocation2 + $0x1e8] sm:$0xff]
    %v93 = vld [vmem:[#allocation2 + $0x1f0] sm:$0xff]
    %v94 = vld [vmem:[#allocation2 + $0x1f8] sm:$0xff]
    %v95 = vld [vmem:[#allocation2 + $0x200] sm:$0xff]
    %v96 = vld [vmem:[#allocation2 + $0x208] sm:$0xff]
    %v97 = vld [vmem:[#allocation2 + $0x210] sm:$0xff]
    %v98 = vld [vmem:[#allocation2 + $0x218] sm:$0xff]
    %v99 = vld [vmem:[#allocation2 + $0x220] sm:$0xff]
    %v100 = vld [vmem:[#allocation2 + $0x228] sm:$0xff]
    %v101 = vld [vmem:[#allocation2 + $0x230] sm:$0xff]
    %v102 = vld [vmem:[#allocation2 + $0x238] sm:$0xff]
    %v103 = vld [vmem:[#allocation2 + $0x240] sm:$0xff]
    %v104 = vld [vmem:[#allocation2 + $0x248] sm:$0xff]
    %v105 = vld [vmem:[#allocation2 + $0x250] sm:$0xff]
    %v106 = vld [vmem:[#allocation2 + $0x258] sm:$0xff]
    %v107 = vld [vmem:[#allocation2 + $0x260] sm:$0xff]
    %v108 = vld [vmem:[#allocation2 + $0x268] sm:$0xff]
    %v109 = vld [vmem:[#allocation2 + $0x270] sm:$0xff]
    %v110 = vld [vmem:[#allocation2 + $0x278] sm:$0xff]
    %v111 = vld [vmem:[#allocation2 + $0x280] sm:$0xff]
    %v112 = vld [vmem:[#allocation2 + $0x288] sm:$0xff]
    %v113 = vld [vmem:[#allocation2 + $0x290] sm:$0xff]
    %v114 = vld [vmem:[#allocation2 + $0x298] sm:$0xff]
    %v115 = vld [vmem:[#allocation2 + $0x2a0] sm:$0xff]
    %v116 = vld [vmem:[#allocation2 + $0x2a8] sm:$0xff]
    %v117 = vld [vmem:[#allocation2 + $0x2b0] sm:$0xff]
    %v118 = vld [vmem:[#allocation2 + $0x2b8] sm:$0xff]
    %v119 = vld [vmem:[#allocation2 + $0x2c0] sm:$0xff]
    %v120 = vld [vmem:[#allocation2 + $0x2c8] sm:$0xff]
    %v121 = vld [vmem:[#allocation2 + $0x2d0] sm:$0xff]
    %v122 = vld [vmem:[#allocation2 + $0x2d8] sm:$0xff]
    %v123 = vld [vmem:[#allocation2 + $0x2e0] sm:$0xff]
    %v124 = vld [vmem:[#allocation2 + $0x2e8] sm:$0xff]
    %v125 = vld [vmem:[#allocation2 + $0x2f0] sm:$0xff]
    %v126 = vld [vmem:[#allocation2 + $0x2f8] sm:$0xff]
    %v127 = vld [vmem:[#allocation2 + $0x300] sm:$0xff]
    %v128 = vld [vmem:[#allocation2 + $0x308] sm:$0xff]
    %v129 = vld [vmem:[#allocation2 + $0x310] sm:$0xff]
    %v130 = vld [vmem:[#allocation2 + $0x318] sm:$0xff]
    %v131 = vld [vmem:[#allocation2 + $0x320] sm:$0xff]
    %v132 = vld [vmem:[#allocation2 + $0x328] sm:$0xff]
    %v133 = vld [vmem:[#allocation2 + $0x330] sm:$0xff]
    %v134 = vld [vmem:[#allocation2 + $0x338] sm:$0xff]
    %v135 = vld [vmem:[#allocation2 + $0x340] sm:$0xff]
    %v136 = vld [vmem:[#allocation2 + $0x348] sm:$0xff]
    %v137 = vld [vmem:[#allocation2 + $0x350] sm:$0xff]
    %v138 = vld [vmem:[#allocation2 + $0x358] sm:$0xff]
    %v139 = vld [vmem:[#allocation2 + $0x360] sm:$0xff]
    %v140 = vld [vmem:[#allocation2 + $0x368] sm:$0xff]
    %v141 = vld [vmem:[#allocation2 + $0x370] sm:$0xff]
    %v142 = vld [vmem:[#allocation2 + $0x378] sm:$0xff]
    %v143 = vld [vmem:[#allocation2 + $0x380] sm:$0xff]
    %v144 = vld [vmem:[#allocation2 + $0x388] sm:$0xff]
    %v145 = vld [vmem:[#allocation2 + $0x390] sm:$0xff]
    %v146 = vld [vmem:[#allocation2 + $0x398] sm:$0xff]
    %v147 = vld [vmem:[#allocation2 + $0x3a0] sm:$0xff]
    %v148 = vld [vmem:[#allocation2 + $0x3a8] sm:$0xff]
    %v149 = vld [vmem:[#allocation2 + $0x3b0] sm:$0xff]
    %v150 = vld [vmem:[#allocation2 + $0x3b8] sm:$0xff]
    %v151 = vld [vmem:[#allocation2 + $0x3c0] sm:$0xff]
    %v152 = vld [vmem:[#allocation2 + $0x3c8] sm:$0xff]
    %v153 = vld [vmem:[#allocation2 + $0x3d0] sm:$0xff]
    %v154 = vld [vmem:[#allocation2 + $0x3d8] sm:$0xff]
    %v155 = vld [vmem:[#allocation2 + $0x3e0] sm:$0xff]
    %v156 = vld [vmem:[#allocation2 + $0x3e8] sm:$0xff]
    %v157 = vld [vmem:[#allocation2 + $0x3f0] sm:$0xff]
    %v158 = vld [vmem:[#allocation2 + $0x3f8] sm:$0xff]
    %v159 = vld [vmem:[%s2] sm:$0xff]
    %v160 = vld [vmem:[%s2 + $0x8] sm:$0xff]
    %v163 = vlaneseq
    %v164 = vshrl.u32 %v163, 7
    %v165 = vsub.s32 0, %v164
    %v166 = vrot.slane %v159, %v165
    %v167 = vlaneseq
    %v168 = vshrl.u32 %v167, 7
    %v169 = vsub.s32 1, %v168
    %v170 = vrot.slane %v159, %v169
    %v171 = vlaneseq
    %v172 = vshrl.u32 %v171, 7
    %v173 = vsub.s32 2, %v172
    %v174 = vrot.slane %v159, %v173
    %v175 = vlaneseq
    %v176 = vshrl.u32 %v175, 7
    %v177 = vsub.s32 3, %v176
    %v178 = vrot.slane %v159, %v177
    %v179 = vlaneseq
    %v180 = vshrl.u32 %v179, 7
    %v181 = vsub.s32 4, %v180
    %v182 = vrot.slane %v159, %v181
    %v183 = vlaneseq
    %v184 = vshrl.u32 %v183, 7
    %v185 = vsub.s32 5, %v184
    %v186 = vrot.slane %v159, %v185
    %v187 = vlaneseq
    %v188 = vshrl.u32 %v187, 7
    %v189 = vsub.s32 6, %v188
    %v190 = vrot.slane %v159, %v189
    %v191 = vlaneseq
    %v192 = vshrl.u32 %v191, 7
    %v193 = vsub.s32 7, %v192
    %v194 = vrot.slane %v159, %v193
    %v195 = vlaneseq
    %v196 = vshrl.u32 %v195, 7
    %v197 = vsub.s32 0, %v196
    %v198 = vrot.slane %v160, %v197
    %v199 = vlaneseq
    %v200 = vshrl.u32 %v199, 7
    %v201 = vsub.s32 1, %v200
    %v202 = vrot.slane %v160, %v201
    %v203 = vlaneseq
    %v204 = vshrl.u32 %v203, 7
    %v205 = vsub.s32 2, %v204
    %v206 = vrot.slane %v160, %v205
    %v207 = vlaneseq
    %v208 = vshrl.u32 %v207, 7
    %v209 = vsub.s32 3, %v208
    %v210 = vrot.slane %v160, %v209
    %v211 = vlaneseq
    %v212 = vshrl.u32 %v211, 7
    %v213 = vsub.s32 4, %v212
    %v214 = vrot.slane %v160, %v213
    %v215 = vlaneseq
    %v216 = vshrl.u32 %v215, 7
    %v217 = vsub.s32 5, %v216
    %v218 = vrot.slane %v160, %v217
    %v219 = vlaneseq
    %v220 = vshrl.u32 %v219, 7
    %v221 = vsub.s32 6, %v220
    %v222 = vrot.slane %v160, %v221
    %v223 = vlaneseq
    %v224 = vshrl.u32 %v223, 7
    %v225 = vsub.s32 7, %v224
    %v226 = vrot.slane %v160, %v225
    %v371 = vunpack.c.l.b16 %v31
    %v372 = vunpack.c.h.b16 %v31
    %v373 = vunpack.c.l.b16 %v32
    %v374 = vunpack.c.h.b16 %v32
    %v375 = vunpack.c.l.b16 %v33
    %v376 = vunpack.c.h.b16 %v33
    %v377 = vunpack.c.l.b16 %v34
    %v378 = vunpack.c.h.b16 %v34
    %v379 = vunpack.c.l.b16 %v35
    %v380 = vunpack.c.h.b16 %v35
    %v381 = vunpack.c.l.b16 %v36
    %v382 = vunpack.c.h.b16 %v36
    %v383 = vunpack.c.l.b16 %v37
    %v384 = vunpack.c.h.b16 %v37
    %v385 = vunpack.c.l.b16 %v38
    %v386 = vunpack.c.h.b16 %v38
    %v387 = vunpack.c.l.b16 %v39
    %v388 = vunpack.c.h.b16 %v39
    %v389 = vunpack.c.l.b16 %v40
    %v390 = vunpack.c.h.b16 %v40
    %v391 = vunpack.c.l.b16 %v41
    %v392 = vunpack.c.h.b16 %v41
    %v393 = vunpack.c.l.b16 %v42
    %v394 = vunpack.c.h.b16 %v42
    %v395 = vunpack.c.l.b16 %v43
    %v396 = vunpack.c.h.b16 %v43
    %v397 = vunpack.c.l.b16 %v44
    %v398 = vunpack.c.h.b16 %v44
    %v399 = vunpack.c.l.b16 %v45
    %v400 = vunpack.c.h.b16 %v45
    %v401 = vunpack.c.l.b16 %v46
    %v402 = vunpack.c.h.b16 %v46
    %v403 = vunpack.c.l.b16 %v47
    %v404 = vunpack.c.h.b16 %v47
    %v405 = vunpack.c.l.b16 %v48
    %v406 = vunpack.c.h.b16 %v48
    %v407 = vunpack.c.l.b16 %v49
    %v408 = vunpack.c.h.b16 %v49
    %v409 = vunpack.c.l.b16 %v50
    %v410 = vunpack.c.h.b16 %v50
    %v411 = vunpack.c.l.b16 %v51
    %v412 = vunpack.c.h.b16 %v51
    %v413 = vunpack.c.l.b16 %v52
    %v414 = vunpack.c.h.b16 %v52
    %v415 = vunpack.c.l.b16 %v53
    %v416 = vunpack.c.h.b16 %v53
    %v417 = vunpack.c.l.b16 %v54
    %v418 = vunpack.c.h.b16 %v54
    %v419 = vunpack.c.l.b16 %v55
    %v420 = vunpack.c.h.b16 %v55
    %v421 = vunpack.c.l.b16 %v56
    %v422 = vunpack.c.h.b16 %v56
    %v423 = vunpack.c.l.b16 %v57
    %v424 = vunpack.c.h.b16 %v57
    %v425 = vunpack.c.l.b16 %v58
    %v426 = vunpack.c.h.b16 %v58
    %v427 = vunpack.c.l.b16 %v59
    %v428 = vunpack.c.h.b16 %v59
    %v429 = vunpack.c.l.b16 %v60
    %v430 = vunpack.c.h.b16 %v60
    %v431 = vunpack.c.l.b16 %v61
    %v432 = vunpack.c.h.b16 %v61
    %v433 = vunpack.c.l.b16 %v62
    %v434 = vunpack.c.h.b16 %v62
    %v435 = vunpack.c.l.b16 %v63
    %v436 = vunpack.c.h.b16 %v63
    %v437 = vunpack.c.l.b16 %v64
    %v438 = vunpack.c.h.b16 %v64
    %v439 = vunpack.c.l.b16 %v65
    %v440 = vunpack.c.h.b16 %v65
    %v441 = vunpack.c.l.b16 %v66
    %v442 = vunpack.c.h.b16 %v66
    %v443 = vunpack.c.l.b16 %v67
    %v444 = vunpack.c.h.b16 %v67
    %v445 = vunpack.c.l.b16 %v68
    %v446 = vunpack.c.h.b16 %v68
    %v447 = vunpack.c.l.b16 %v69
    %v448 = vunpack.c.h.b16 %v69
    %v449 = vunpack.c.l.b16 %v70
    %v450 = vunpack.c.h.b16 %v70
    %v451 = vunpack.c.l.b16 %v71
    %v452 = vunpack.c.h.b16 %v71
    %v453 = vunpack.c.l.b16 %v72
    %v454 = vunpack.c.h.b16 %v72
    %v455 = vunpack.c.l.b16 %v73
    %v456 = vunpack.c.h.b16 %v73
    %v457 = vunpack.c.l.b16 %v74
    %v458 = vunpack.c.h.b16 %v74
    %v459 = vunpack.c.l.b16 %v75
    %v460 = vunpack.c.h.b16 %v75
    %v461 = vunpack.c.l.b16 %v76
    %v462 = vunpack.c.h.b16 %v76
    %v463 = vunpack.c.l.b16 %v77
    %v464 = vunpack.c.h.b16 %v77
    %v465 = vunpack.c.l.b16 %v78
    %v466 = vunpack.c.h.b16 %v78
    %v467 = vunpack.c.l.b16 %v79
    %v468 = vunpack.c.h.b16 %v79
    %v469 = vunpack.c.l.b16 %v80
    %v470 = vunpack.c.h.b16 %v80
    %v471 = vunpack.c.l.b16 %v81
    %v472 = vunpack.c.h.b16 %v81
    %v473 = vunpack.c.l.b16 %v82
    %v474 = vunpack.c.h.b16 %v82
    %v475 = vunpack.c.l.b16 %v83
    %v476 = vunpack.c.h.b16 %v83
    %v477 = vunpack.c.l.b16 %v84
    %v478 = vunpack.c.h.b16 %v84
    %v479 = vunpack.c.l.b16 %v85
    %v480 = vunpack.c.h.b16 %v85
    %v481 = vunpack.c.l.b16 %v86
    %v482 = vunpack.c.h.b16 %v86
    %v483 = vunpack.c.l.b16 %v87
    %v484 = vunpack.c.h.b16 %v87
    %v485 = vunpack.c.l.b16 %v88
    %v486 = vunpack.c.h.b16 %v88
    %v487 = vunpack.c.l.b16 %v89
    %v488 = vunpack.c.h.b16 %v89
    %v489 = vunpack.c.l.b16 %v90
    %v490 = vunpack.c.h.b16 %v90
    %v491 = vunpack.c.l.b16 %v91
    %v492 = vunpack.c.h.b16 %v91
    %v493 = vunpack.c.l.b16 %v92
    %v494 = vunpack.c.h.b16 %v92
    %v495 = vunpack.c.l.b16 %v93
    %v496 = vunpack.c.h.b16 %v93
    %v497 = vunpack.c.l.b16 %v94
    %v498 = vunpack.c.h.b16 %v94
    %v499 = vunpack.c.l.b16 %v95
    %v500 = vunpack.c.h.b16 %v95
    %v501 = vunpack.c.l.b16 %v96
    %v502 = vunpack.c.h.b16 %v96
    %v503 = vunpack.c.l.b16 %v97
    %v504 = vunpack.c.h.b16 %v97
    %v505 = vunpack.c.l.b16 %v98
    %v506 = vunpack.c.h.b16 %v98
    %v507 = vunpack.c.l.b16 %v99
    %v508 = vunpack.c.h.b16 %v99
    %v509 = vunpack.c.l.b16 %v100
    %v510 = vunpack.c.h.b16 %v100
    %v511 = vunpack.c.l.b16 %v101
    %v512 = vunpack.c.h.b16 %v101
    %v513 = vunpack.c.l.b16 %v102
    %v514 = vunpack.c.h.b16 %v102
    %v515 = vunpack.c.l.b16 %v103
    %v516 = vunpack.c.h.b16 %v103
    %v517 = vunpack.c.l.b16 %v104
    %v518 = vunpack.c.h.b16 %v104
    %v519 = vunpack.c.l.b16 %v105
    %v520 = vunpack.c.h.b16 %v105
    %v521 = vunpack.c.l.b16 %v106
    %v522 = vunpack.c.h.b16 %v106
    %v523 = vunpack.c.l.b16 %v107
    %v524 = vunpack.c.h.b16 %v107
    %v525 = vunpack.c.l.b16 %v108
    %v526 = vunpack.c.h.b16 %v108
    %v527 = vunpack.c.l.b16 %v109
    %v528 = vunpack.c.h.b16 %v109
    %v529 = vunpack.c.l.b16 %v110
    %v530 = vunpack.c.h.b16 %v110
    %v531 = vunpack.c.l.b16 %v111
    %v532 = vunpack.c.h.b16 %v111
    %v533 = vunpack.c.l.b16 %v112
    %v534 = vunpack.c.h.b16 %v112
    %v535 = vunpack.c.l.b16 %v113
    %v536 = vunpack.c.h.b16 %v113
    %v537 = vunpack.c.l.b16 %v114
    %v538 = vunpack.c.h.b16 %v114
    %v539 = vunpack.c.l.b16 %v115
    %v540 = vunpack.c.h.b16 %v115
    %v541 = vunpack.c.l.b16 %v116
    %v542 = vunpack.c.h.b16 %v116
    %v543 = vunpack.c.l.b16 %v117
    %v544 = vunpack.c.h.b16 %v117
    %v545 = vunpack.c.l.b16 %v118
    %v546 = vunpack.c.h.b16 %v118
    %v547 = vunpack.c.l.b16 %v119
    %v548 = vunpack.c.h.b16 %v119
    %v549 = vunpack.c.l.b16 %v120
    %v550 = vunpack.c.h.b16 %v120
    %v551 = vunpack.c.l.b16 %v121
    %v552 = vunpack.c.h.b16 %v121
    %v553 = vunpack.c.l.b16 %v122
    %v554 = vunpack.c.h.b16 %v122
    %v555 = vunpack.c.l.b16 %v123
    %v556 = vunpack.c.h.b16 %v123
    %v557 = vunpack.c.l.b16 %v124
    %v558 = vunpack.c.h.b16 %v124
    %v559 = vunpack.c.l.b16 %v125
    %v560 = vunpack.c.h.b16 %v125
    %v561 = vunpack.c.l.b16 %v126
    %v562 = vunpack.c.h.b16 %v126
    %v563 = vunpack.c.l.b16 %v127
    %v564 = vunpack.c.h.b16 %v127
    %v565 = vunpack.c.l.b16 %v128
    %v566 = vunpack.c.h.b16 %v128
    %v567 = vunpack.c.l.b16 %v129
    %v568 = vunpack.c.h.b16 %v129
    %v569 = vunpack.c.l.b16 %v130
    %v570 = vunpack.c.h.b16 %v130
    %v571 = vunpack.c.l.b16 %v131
    %v572 = vunpack.c.h.b16 %v131
    %v573 = vunpack.c.l.b16 %v132
    %v574 = vunpack.c.h.b16 %v132
    %v575 = vunpack.c.l.b16 %v133
    %v576 = vunpack.c.h.b16 %v133
    %v577 = vunpack.c.l.b16 %v134
    %v578 = vunpack.c.h.b16 %v134
    %v579 = vunpack.c.l.b16 %v135
    %v580 = vunpack.c.h.b16 %v135
    %v581 = vunpack.c.l.b16 %v136
    %v582 = vunpack.c.h.b16 %v136
    %v583 = vunpack.c.l.b16 %v137
    %v584 = vunpack.c.h.b16 %v137
    %v585 = vunpack.c.l.b16 %v138
    %v586 = vunpack.c.h.b16 %v138
    %v587 = vunpack.c.l.b16 %v139
    %v588 = vunpack.c.h.b16 %v139
    %v589 = vunpack.c.l.b16 %v140
    %v590 = vunpack.c.h.b16 %v140
    %v591 = vunpack.c.l.b16 %v141
    %v592 = vunpack.c.h.b16 %v141
    %v593 = vunpack.c.l.b16 %v142
    %v594 = vunpack.c.h.b16 %v142
    %v595 = vunpack.c.l.b16 %v143
    %v596 = vunpack.c.h.b16 %v143
    %v597 = vunpack.c.l.b16 %v144
    %v598 = vunpack.c.h.b16 %v144
    %v599 = vunpack.c.l.b16 %v145
    %v600 = vunpack.c.h.b16 %v145
    %v601 = vunpack.c.l.b16 %v146
    %v602 = vunpack.c.h.b16 %v146
    %v603 = vunpack.c.l.b16 %v147
    %v604 = vunpack.c.h.b16 %v147
    %v605 = vunpack.c.l.b16 %v148
    %v606 = vunpack.c.h.b16 %v148
    %v607 = vunpack.c.l.b16 %v149
    %v608 = vunpack.c.h.b16 %v149
    %v609 = vunpack.c.l.b16 %v150
    %v610 = vunpack.c.h.b16 %v150
    %v611 = vunpack.c.l.b16 %v151
    %v612 = vunpack.c.h.b16 %v151
    %v613 = vunpack.c.l.b16 %v152
    %v614 = vunpack.c.h.b16 %v152
    %v615 = vunpack.c.l.b16 %v153
    %v616 = vunpack.c.h.b16 %v153
    %v617 = vunpack.c.l.b16 %v154
    %v618 = vunpack.c.h.b16 %v154
    %v619 = vunpack.c.l.b16 %v155
    %v620 = vunpack.c.h.b16 %v155
    %v621 = vunpack.c.l.b16 %v156
    %v622 = vunpack.c.h.b16 %v156
    %v623 = vunpack.c.l.b16 %v157
    %v624 = vunpack.c.h.b16 %v157
    %v625 = vunpack.c.l.b16 %v158
    %v626 = vunpack.c.h.b16 %v158
    %v627 = vpack.c.b16 %v387, %v371
    %v628 = vpack.c.b16 %v388, %v372
    %v629 = vpack.c.b16 %v389, %v373
    %v630 = vpack.c.b16 %v390, %v374
    %v631 = vpack.c.b16 %v391, %v375
    %v632 = vpack.c.b16 %v392, %v376
    %v633 = vpack.c.b16 %v393, %v377
    %v634 = vpack.c.b16 %v394, %v378
    %v635 = vpack.c.b16 %v395, %v379
    %v636 = vpack.c.b16 %v396, %v380
    %v637 = vpack.c.b16 %v397, %v381
    %v638 = vpack.c.b16 %v398, %v382
    %v639 = vpack.c.b16 %v399, %v383
    %v640 = vpack.c.b16 %v400, %v384
    %v641 = vpack.c.b16 %v401, %v385
    %v642 = vpack.c.b16 %v402, %v386
    %v643 = vpack.c.b16 %v419, %v403
    %v644 = vpack.c.b16 %v420, %v404
    %v645 = vpack.c.b16 %v421, %v405
    %v646 = vpack.c.b16 %v422, %v406
    %v647 = vpack.c.b16 %v423, %v407
    %v648 = vpack.c.b16 %v424, %v408
    %v649 = vpack.c.b16 %v425, %v409
    %v650 = vpack.c.b16 %v426, %v410
    %v651 = vpack.c.b16 %v427, %v411
    %v652 = vpack.c.b16 %v428, %v412
    %v653 = vpack.c.b16 %v429, %v413
    %v654 = vpack.c.b16 %v430, %v414
    %v655 = vpack.c.b16 %v431, %v415
    %v656 = vpack.c.b16 %v432, %v416
    %v657 = vpack.c.b16 %v433, %v417
    %v658 = vpack.c.b16 %v434, %v418
    %v659 = vpack.c.b16 %v451, %v435
    %v660 = vpack.c.b16 %v452, %v436
    %v661 = vpack.c.b16 %v453, %v437
    %v662 = vpack.c.b16 %v454, %v438
    %v663 = vpack.c.b16 %v455, %v439
    %v664 = vpack.c.b16 %v456, %v440
    %v665 = vpack.c.b16 %v457, %v441
    %v666 = vpack.c.b16 %v458, %v442
    %v667 = vpack.c.b16 %v459, %v443
    %v668 = vpack.c.b16 %v460, %v444
    %v669 = vpack.c.b16 %v461, %v445
    %v670 = vpack.c.b16 %v462, %v446
    %v671 = vpack.c.b16 %v463, %v447
    %v672 = vpack.c.b16 %v464, %v448
    %v673 = vpack.c.b16 %v465, %v449
    %v674 = vpack.c.b16 %v466, %v450
    %v675 = vpack.c.b16 %v483, %v467
    %v676 = vpack.c.b16 %v484, %v468
    %v677 = vpack.c.b16 %v485, %v469
    %v678 = vpack.c.b16 %v486, %v470
    %v679 = vpack.c.b16 %v487, %v471
    %v680 = vpack.c.b16 %v488, %v472
    %v681 = vpack.c.b16 %v489, %v473
    %v682 = vpack.c.b16 %v490, %v474
    %v683 = vpack.c.b16 %v491, %v475
    %v684 = vpack.c.b16 %v492, %v476
    %v685 = vpack.c.b16 %v493, %v477
    %v686 = vpack.c.b16 %v494, %v478
    %v687 = vpack.c.b16 %v495, %v479
    %v688 = vpack.c.b16 %v496, %v480
    %v689 = vpack.c.b16 %v497, %v481
    %v690 = vpack.c.b16 %v498, %v482
    %v691 = vpack.c.b16 %v515, %v499
    %v692 = vpack.c.b16 %v516, %v500
    %v693 = vpack.c.b16 %v517, %v501
    %v694 = vpack.c.b16 %v518, %v502
    %v695 = vpack.c.b16 %v519, %v503
    %v696 = vpack.c.b16 %v520, %v504
    %v697 = vpack.c.b16 %v521, %v505
    %v698 = vpack.c.b16 %v522, %v506
    %v699 = vpack.c.b16 %v523, %v507
    %v700 = vpack.c.b16 %v524, %v508
    %v701 = vpack.c.b16 %v525, %v509
    %v702 = vpack.c.b16 %v526, %v510
    %v703 = vpack.c.b16 %v527, %v511
    %v704 = vpack.c.b16 %v528, %v512
    %v705 = vpack.c.b16 %v529, %v513
    %v706 = vpack.c.b16 %v530, %v514
    %v707 = vpack.c.b16 %v547, %v531
    %v708 = vpack.c.b16 %v548, %v532
    %v709 = vpack.c.b16 %v549, %v533
    %v710 = vpack.c.b16 %v550, %v534
    %v711 = vpack.c.b16 %v551, %v535
    %v712 = vpack.c.b16 %v552, %v536
    %v713 = vpack.c.b16 %v553, %v537
    %v714 = vpack.c.b16 %v554, %v538
    %v715 = vpack.c.b16 %v555, %v539
    %v716 = vpack.c.b16 %v556, %v540
    %v717 = vpack.c.b16 %v557, %v541
    %v718 = vpack.c.b16 %v558, %v542
    %v719 = vpack.c.b16 %v559, %v543
    %v720 = vpack.c.b16 %v560, %v544
    %v721 = vpack.c.b16 %v561, %v545
    %v722 = vpack.c.b16 %v562, %v546
    %v723 = vpack.c.b16 %v579, %v563
    %v724 = vpack.c.b16 %v580, %v564
    %v725 = vpack.c.b16 %v581, %v565
    %v726 = vpack.c.b16 %v582, %v566
    %v727 = vpack.c.b16 %v583, %v567
    %v728 = vpack.c.b16 %v584, %v568
    %v729 = vpack.c.b16 %v585, %v569
    %v730 = vpack.c.b16 %v586, %v570
    %v731 = vpack.c.b16 %v587, %v571
    %v732 = vpack.c.b16 %v588, %v572
    %v733 = vpack.c.b16 %v589, %v573
    %v734 = vpack.c.b16 %v590, %v574
    %v735 = vpack.c.b16 %v591, %v575
    %v736 = vpack.c.b16 %v592, %v576
    %v737 = vpack.c.b16 %v593, %v577
    %v738 = vpack.c.b16 %v594, %v578
    %v739 = vpack.c.b16 %v611, %v595
    %v740 = vpack.c.b16 %v612, %v596
    %v741 = vpack.c.b16 %v613, %v597
    %v742 = vpack.c.b16 %v614, %v598
    %v743 = vpack.c.b16 %v615, %v599
    %v744 = vpack.c.b16 %v616, %v600
    %v745 = vpack.c.b16 %v617, %v601
    %v746 = vpack.c.b16 %v618, %v602
    %v747 = vpack.c.b16 %v619, %v603
    %v748 = vpack.c.b16 %v620, %v604
    %v749 = vpack.c.b16 %v621, %v605
    %v750 = vpack.c.b16 %v622, %v606
    %v751 = vpack.c.b16 %v623, %v607
    %v752 = vpack.c.b16 %v624, %v608
    %v753 = vpack.c.b16 %v625, %v609
    %v754 = vpack.c.b16 %v626, %v610
    %883 = vmatprep.subr.bf16.mxu0 %v628
    %884 = vmatpush1.bf16.msra.mxu0 %v627
    %885 = vmatprep.subr.bf16.mxu0 %v644
    %886 = vmatpush1.bf16.msra.mxu0 %v643
    %887 = vmatprep.subr.bf16.mxu0 %v660
    %888 = vmatpush1.bf16.msra.mxu0 %v659
    %889 = vmatprep.subr.bf16.mxu0 %v676
    %890 = vmatpush1.bf16.msra.mxu0 %v675
    %891 = vmatprep.subr.bf16.mxu0 %v692
    %892 = vmatpush1.bf16.msra.mxu0 %v691
    %893 = vmatprep.subr.bf16.mxu0 %v708
    %894 = vmatpush1.bf16.msra.mxu0 %v707
    %895 = vmatprep.subr.bf16.mxu0 %v724
    %896 = vmatpush1.bf16.msra.mxu0 %v723
    %897 = vmatprep.subr.bf16.mxu0 %v740
    %898 = vmatpush1.bf16.msra.mxu0 %v739
    %899 = vmatprep.subr.bf16.mxu0 0
    %900 = vmatpush1.bf16.msra.mxu0 0
    %901 = vmatprep.subr.bf16.mxu0 0
    %902 = vmatpush1.bf16.msra.mxu0 0
    %903 = vmatprep.subr.bf16.mxu0 0
    %904 = vmatpush1.bf16.msra.mxu0 0
    %905 = vmatprep.subr.bf16.mxu0 0
    %906 = vmatpush1.bf16.msra.mxu0 0
    %907 = vmatprep.subr.bf16.mxu0 0
    %908 = vmatpush1.bf16.msra.mxu0 0
    %909 = vmatprep.subr.bf16.mxu0 0
    %910 = vmatpush1.bf16.msra.mxu0 0
    %911 = vmatprep.subr.bf16.mxu0 0
    %912 = vmatpush1.bf16.msra.mxu0 0
    %913 = vmatprep.subr.bf16.mxu0 0
    %914 = vmatpush1.bf16.msra.mxu0 0
    %915 = vmatprep.mubr.bf16.mxu0 0
    %916 = vmatmul.mubr.bf16.gmra.mrb[0].mxu0 %v30
    %v917 = vpop.f32.mrb[0].mxu0
    %v918 = vadd.f32 %v166, %v917
    %v919 = vpop.f32.mrb[0].mxu0
    %v920 = vadd.f32 %v170, %v919
    %v921 = vpop.f32.mrb[0].mxu0
    %v922 = vpop.f32.mrb[0].mxu0
    %923 = vdwg.mxu0
    %924 = vmatprep.subr.bf16.mxu0 %v630
    %925 = vmatpush1.bf16.msra.mxu0 %v629
    %926 = vmatprep.subr.bf16.mxu0 %v646
    %927 = vmatpush1.bf16.msra.mxu0 %v645
    %928 = vmatprep.subr.bf16.mxu0 %v662
    %929 = vmatpush1.bf16.msra.mxu0 %v661
    %930 = vmatprep.subr.bf16.mxu0 %v678
    %931 = vmatpush1.bf16.msra.mxu0 %v677
    %932 = vmatprep.subr.bf16.mxu0 %v694
    %933 = vmatpush1.bf16.msra.mxu0 %v693
    %934 = vmatprep.subr.bf16.mxu0 %v710
    %935 = vmatpush1.bf16.msra.mxu0 %v709
    %936 = vmatprep.subr.bf16.mxu0 %v726
    %937 = vmatpush1.bf16.msra.mxu0 %v725
    %938 = vmatprep.subr.bf16.mxu0 %v742
    %939 = vmatpush1.bf16.msra.mxu0 %v741
    %940 = vmatprep.subr.bf16.mxu0 0
    %941 = vmatpush1.bf16.msra.mxu0 0
    %942 = vmatprep.subr.bf16.mxu0 0
    %943 = vmatpush1.bf16.msra.mxu0 0
    %944 = vmatprep.subr.bf16.mxu0 0
    %945 = vmatpush1.bf16.msra.mxu0 0
    %946 = vmatprep.subr.bf16.mxu0 0
    %947 = vmatpush1.bf16.msra.mxu0 0
    %948 = vmatprep.subr.bf16.mxu0 0
    %949 = vmatpush1.bf16.msra.mxu0 0
    %950 = vmatprep.subr.bf16.mxu0 0
    %951 = vmatpush1.bf16.msra.mxu0 0
    %952 = vmatprep.subr.bf16.mxu0 0
    %953 = vmatpush1.bf16.msra.mxu0 0
    %954 = vmatprep.subr.bf16.mxu0 0
    %955 = vmatpush1.bf16.msra.mxu0 0
    %956 = vmatprep.mubr.bf16.mxu0 0
    %957 = vmatmul.mubr.bf16.gmra.mrb[0].mxu0 %v30
    %v958 = vpop.f32.mrb[0].mxu0
    %v959 = vadd.f32 %v174, %v958
    %v960 = vpop.f32.mrb[0].mxu0
    %v961 = vadd.f32 %v178, %v960
    %v962 = vpop.f32.mrb[0].mxu0
    %v963 = vpop.f32.mrb[0].mxu0
    %964 = vdwg.mxu0
    %965 = vmatprep.subr.bf16.mxu0 %v632
    %966 = vmatpush1.bf16.msra.mxu0 %v631
    %967 = vmatprep.subr.bf16.mxu0 %v648
    %968 = vmatpush1.bf16.msra.mxu0 %v647
    %969 = vmatprep.subr.bf16.mxu0 %v664
    %970 = vmatpush1.bf16.msra.mxu0 %v663
    %971 = vmatprep.subr.bf16.mxu0 %v680
    %972 = vmatpush1.bf16.msra.mxu0 %v679
    %973 = vmatprep.subr.bf16.mxu0 %v696
    %974 = vmatpush1.bf16.msra.mxu0 %v695
    %975 = vmatprep.subr.bf16.mxu0 %v712
    %976 = vmatpush1.bf16.msra.mxu0 %v711
    %977 = vmatprep.subr.bf16.mxu0 %v728
    %978 = vmatpush1.bf16.msra.mxu0 %v727
    %979 = vmatprep.subr.bf16.mxu0 %v744
    %980 = vmatpush1.bf16.msra.mxu0 %v743
    %981 = vmatprep.subr.bf16.mxu0 0
    %982 = vmatpush1.bf16.msra.mxu0 0
    %983 = vmatprep.subr.bf16.mxu0 0
    %984 = vmatpush1.bf16.msra.mxu0 0
    %985 = vmatprep.subr.bf16.mxu0 0
    %986 = vmatpush1.bf16.msra.mxu0 0
    %987 = vmatprep.subr.bf16.mxu0 0
    %988 = vmatpush1.bf16.msra.mxu0 0
    %989 = vmatprep.subr.bf16.mxu0 0
    %990 = vmatpush1.bf16.msra.mxu0 0
    %991 = vmatprep.subr.bf16.mxu0 0
    %992 = vmatpush1.bf16.msra.mxu0 0
    %993 = vmatprep.subr.bf16.mxu0 0
    %994 = vmatpush1.bf16.msra.mxu0 0
    %995 = vmatprep.subr.bf16.mxu0 0
    %996 = vmatpush1.bf16.msra.mxu0 0
    %997 = vmatprep.mubr.bf16.mxu0 0
    %998 = vmatmul.mubr.bf16.gmra.mrb[0].mxu0 %v30
    %v999 = vpop.f32.mrb[0].mxu0
    %v1000 = vadd.f32 %v182, %v999
    %v1001 = vpop.f32.mrb[0].mxu0
    %v1002 = vadd.f32 %v186, %v1001
    %v1003 = vpop.f32.mrb[0].mxu0
    %v1004 = vpop.f32.mrb[0].mxu0
    %1005 = vdwg.mxu0
    %1006 = vmatprep.subr.bf16.mxu0 %v634
    %1007 = vmatpush1.bf16.msra.mxu0 %v633
    %1008 = vmatprep.subr.bf16.mxu0 %v650
    %1009 = vmatpush1.bf16.msra.mxu0 %v649
    %1010 = vmatprep.subr.bf16.mxu0 %v666
    %1011 = vmatpush1.bf16.msra.mxu0 %v665
    %1012 = vmatprep.subr.bf16.mxu0 %v682
    %1013 = vmatpush1.bf16.msra.mxu0 %v681
    %1014 = vmatprep.subr.bf16.mxu0 %v698
    %1015 = vmatpush1.bf16.msra.mxu0 %v697
    %1016 = vmatprep.subr.bf16.mxu0 %v714
    %1017 = vmatpush1.bf16.msra.mxu0 %v713
    %1018 = vmatprep.subr.bf16.mxu0 %v730
    %1019 = vmatpush1.bf16.msra.mxu0 %v729
    %1020 = vmatprep.subr.bf16.mxu0 %v746
    %1021 = vmatpush1.bf16.msra.mxu0 %v745
    %1022 = vmatprep.subr.bf16.mxu0 0
    %1023 = vmatpush1.bf16.msra.mxu0 0
    %1024 = vmatprep.subr.bf16.mxu0 0
    %1025 = vmatpush1.bf16.msra.mxu0 0
    %1026 = vmatprep.subr.bf16.mxu0 0
    %1027 = vmatpush1.bf16.msra.mxu0 0
    %1028 = vmatprep.subr.bf16.mxu0 0
    %1029 = vmatpush1.bf16.msra.mxu0 0
    %1030 = vmatprep.subr.bf16.mxu0 0
    %1031 = vmatpush1.bf16.msra.mxu0 0
    %1032 = vmatprep.subr.bf16.mxu0 0
    %1033 = vmatpush1.bf16.msra.mxu0 0
    %1034 = vmatprep.subr.bf16.mxu0 0
    %1035 = vmatpush1.bf16.msra.mxu0 0
    %1036 = vmatprep.subr.bf16.mxu0 0
    %1037 = vmatpush1.bf16.msra.mxu0 0
    %1038 = vmatprep.mubr.bf16.mxu0 0
    %1039 = vmatmul.mubr.bf16.gmra.mrb[0].mxu0 %v30
    %v1040 = vpop.f32.mrb[0].mxu0
    %v1041 = vadd.f32 %v190, %v1040
    %v1042 = vpop.f32.mrb[0].mxu0
    %v1043 = vadd.f32 %v194, %v1042
    %v1044 = vpop.f32.mrb[0].mxu0
    %v1045 = vpop.f32.mrb[0].mxu0
    %1046 = vdwg.mxu0
    %1047 = vmatprep.subr.bf16.mxu0 %v636
    %1048 = vmatpush1.bf16.msra.mxu0 %v635
    %1049 = vmatprep.subr.bf16.mxu0 %v652
    %1050 = vmatpush1.bf16.msra.mxu0 %v651
    %1051 = vmatprep.subr.bf16.mxu0 %v668
    %1052 = vmatpush1.bf16.msra.mxu0 %v667
    %1053 = vmatprep.subr.bf16.mxu0 %v684
    %1054 = vmatpush1.bf16.msra.mxu0 %v683
    %1055 = vmatprep.subr.bf16.mxu0 %v700
    %1056 = vmatpush1.bf16.msra.mxu0 %v699
    %1057 = vmatprep.subr.bf16.mxu0 %v716
    %1058 = vmatpush1.bf16.msra.mxu0 %v715
    %1059 = vmatprep.subr.bf16.mxu0 %v732
    %1060 = vmatpush1.bf16.msra.mxu0 %v731
    %1061 = vmatprep.subr.bf16.mxu0 %v748
    %1062 = vmatpush1.bf16.msra.mxu0 %v747
    %1063 = vmatprep.subr.bf16.mxu0 0
    %1064 = vmatpush1.bf16.msra.mxu0 0
    %1065 = vmatprep.subr.bf16.mxu0 0
    %1066 = vmatpush1.bf16.msra.mxu0 0
    %1067 = vmatprep.subr.bf16.mxu0 0
    %1068 = vmatpush1.bf16.msra.mxu0 0
    %1069 = vmatprep.subr.bf16.mxu0 0
    %1070 = vmatpush1.bf16.msra.mxu0 0
    %1071 = vmatprep.subr.bf16.mxu0 0
    %1072 = vmatpush1.bf16.msra.mxu0 0
    %1073 = vmatprep.subr.bf16.mxu0 0
    %1074 = vmatpush1.bf16.msra.mxu0 0
    %1075 = vmatprep.subr.bf16.mxu0 0
    %1076 = vmatpush1.bf16.msra.mxu0 0
    %1077 = vmatprep.subr.bf16.mxu0 0
    %1078 = vmatpush1.bf16.msra.mxu0 0
    %1079 = vmatprep.mubr.bf16.mxu0 0
    %1080 = vmatmul.mubr.bf16.gmra.mrb[0].mxu0 %v30
    %v1081 = vpop.f32.mrb[0].mxu0
    %v1082 = vadd.f32 %v198, %v1081
    %v1083 = vpop.f32.mrb[0].mxu0
    %v1084 = vadd.f32 %v202, %v1083
    %v1085 = vpop.f32.mrb[0].mxu0
    %v1086 = vpop.f32.mrb[0].mxu0
    %1087 = vdwg.mxu0
    %1088 = vmatprep.subr.bf16.mxu0 %v638
    %1089 = vmatpush1.bf16.msra.mxu0 %v637
    %1090 = vmatprep.subr.bf16.mxu0 %v654
    %1091 = vmatpush1.bf16.msra.mxu0 %v653
    %1092 = vmatprep.subr.bf16.mxu0 %v670
    %1093 = vmatpush1.bf16.msra.mxu0 %v669
    %1094 = vmatprep.subr.bf16.mxu0 %v686
    %1095 = vmatpush1.bf16.msra.mxu0 %v685
    %1096 = vmatprep.subr.bf16.mxu0 %v702
    %1097 = vmatpush1.bf16.msra.mxu0 %v701
    %1098 = vmatprep.subr.bf16.mxu0 %v718
    %1099 = vmatpush1.bf16.msra.mxu0 %v717
    %1100 = vmatprep.subr.bf16.mxu0 %v734
    %1101 = vmatpush1.bf16.msra.mxu0 %v733
    %1102 = vmatprep.subr.bf16.mxu0 %v750
    %1103 = vmatpush1.bf16.msra.mxu0 %v749
    %1104 = vmatprep.subr.bf16.mxu0 0
    %1105 = vmatpush1.bf16.msra.mxu0 0
    %1106 = vmatprep.subr.bf16.mxu0 0
    %1107 = vmatpush1.bf16.msra.mxu0 0
    %1108 = vmatprep.subr.bf16.mxu0 0
    %1109 = vmatpush1.bf16.msra.mxu0 0
    %1110 = vmatprep.subr.bf16.mxu0 0
    %1111 = vmatpush1.bf16.msra.mxu0 0
    %1112 = vmatprep.subr.bf16.mxu0 0
    %1113 = vmatpush1.bf16.msra.mxu0 0
    %1114 = vmatprep.subr.bf16.mxu0 0
    %1115 = vmatpush1.bf16.msra.mxu0 0
    %1116 = vmatprep.subr.bf16.mxu0 0
    %1117 = vmatpush1.bf16.msra.mxu0 0
    %1118 = vmatprep.subr.bf16.mxu0 0
    %1119 = vmatpush1.bf16.msra.mxu0 0
    %1120 = vmatprep.mubr.bf16.mxu0 0
    %1121 = vmatmul.mubr.bf16.gmra.mrb[0].mxu0 %v30
    %v1122 = vpop.f32.mrb[0].mxu0
    %v1123 = vadd.f32 %v206, %v1122
    %v1124 = vpop.f32.mrb[0].mxu0
    %v1125 = vadd.f32 %v210, %v1124
    %v1126 = vpop.f32.mrb[0].mxu0
    %v1127 = vpop.f32.mrb[0].mxu0
    %1128 = vdwg.mxu0
    %1129 = vmatprep.subr.bf16.mxu0 %v640
    %1130 = vmatpush1.bf16.msra.mxu0 %v639
    %1131 = vmatprep.subr.bf16.mxu0 %v656
    %1132 = vmatpush1.bf16.msra.mxu0 %v655
    %1133 = vmatprep.subr.bf16.mxu0 %v672
    %1134 = vmatpush1.bf16.msra.mxu0 %v671
    %1135 = vmatprep.subr.bf16.mxu0 %v688
    %1136 = vmatpush1.bf16.msra.mxu0 %v687
    %1137 = vmatprep.subr.bf16.mxu0 %v704
    %1138 = vmatpush1.bf16.msra.mxu0 %v703
    %1139 = vmatprep.subr.bf16.mxu0 %v720
    %1140 = vmatpush1.bf16.msra.mxu0 %v719
    %1141 = vmatprep.subr.bf16.mxu0 %v736
    %1142 = vmatpush1.bf16.msra.mxu0 %v735
    %1143 = vmatprep.subr.bf16.mxu0 %v752
    %1144 = vmatpush1.bf16.msra.mxu0 %v751
    %1145 = vmatprep.subr.bf16.mxu0 0
    %1146 = vmatpush1.bf16.msra.mxu0 0
    %1147 = vmatprep.subr.bf16.mxu0 0
    %1148 = vmatpush1.bf16.msra.mxu0 0
    %1149 = vmatprep.subr.bf16.mxu0 0
    %1150 = vmatpush1.bf16.msra.mxu0 0
    %1151 = vmatprep.subr.bf16.mxu0 0
    %1152 = vmatpush1.bf16.msra.mxu0 0
    %1153 = vmatprep.subr.bf16.mxu0 0
    %1154 = vmatpush1.bf16.msra.mxu0 0
    %1155 = vmatprep.subr.bf16.mxu0 0
    %1156 = vmatpush1.bf16.msra.mxu0 0
    %1157 = vmatprep.subr.bf16.mxu0 0
    %1158 = vmatpush1.bf16.msra.mxu0 0
    %1159 = vmatprep.subr.bf16.mxu0 0
    %1160 = vmatpush1.bf16.msra.mxu0 0
    %1161 = vmatprep.mubr.bf16.mxu0 0
    %1162 = vmatmul.mubr.bf16.gmra.mrb[0].mxu0 %v30
    %v1163 = vpop.f32.mrb[0].mxu0
    %v1164 = vadd.f32 %v214, %v1163
    %v1165 = vpop.f32.mrb[0].mxu0
    %v1166 = vadd.f32 %v218, %v1165
    %v1167 = vpop.f32.mrb[0].mxu0
    %v1168 = vpop.f32.mrb[0].mxu0
    %1169 = vdwg.mxu0
    %1170 = vmatprep.subr.bf16.mxu0 %v642
    %1171 = vmatpush1.bf16.msra.mxu0 %v641
    %1172 = vmatprep.subr.bf16.mxu0 %v658
    %1173 = vmatpush1.bf16.msra.mxu0 %v657
    %1174 = vmatprep.subr.bf16.mxu0 %v674
    %1175 = vmatpush1.bf16.msra.mxu0 %v673
    %1176 = vmatprep.subr.bf16.mxu0 %v690
    %1177 = vmatpush1.bf16.msra.mxu0 %v689
    %1178 = vmatprep.subr.bf16.mxu0 %v706
    %1179 = vmatpush1.bf16.msra.mxu0 %v705
    %1180 = vmatprep.subr.bf16.mxu0 %v722
    %1181 = vmatpush1.bf16.msra.mxu0 %v721
    %1182 = vmatprep.subr.bf16.mxu0 %v738
    %1183 = vmatpush1.bf16.msra.mxu0 %v737
    %1184 = vmatprep.subr.bf16.mxu0 %v754
    %1185 = vmatpush1.bf16.msra.mxu0 %v753
    %1186 = vmatprep.subr.bf16.mxu0 0
    %1187 = vmatpush1.bf16.msra.mxu0 0
    %1188 = vmatprep.subr.bf16.mxu0 0
    %1189 = vmatpush1.bf16.msra.mxu0 0
    %1190 = vmatprep.subr.bf16.mxu0 0
    %1191 = vmatpush1.bf16.msra.mxu0 0
    %1192 = vmatprep.subr.bf16.mxu0 0
    %1193 = vmatpush1.bf16.msra.mxu0 0
    %1194 = vmatprep.subr.bf16.mxu0 0
    %1195 = vmatpush1.bf16.msra.mxu0 0
    %1196 = vmatprep.subr.bf16.mxu0 0
    %1197 = vmatpush1.bf16.msra.mxu0 0
    %1198 = vmatprep.subr.bf16.mxu0 0
    %1199 = vmatpush1.bf16.msra.mxu0 0
    %1200 = vmatprep.subr.bf16.mxu0 0
    %1201 = vmatpush1.bf16.msra.mxu0 0
    %1202 = vmatprep.mubr.bf16.mxu0 0
    %1203 = vmatmul.mubr.bf16.gmra.mrb[0].mxu0 %v30
    %v1204 = vpop.f32.mrb[0].mxu0
    %v1205 = vadd.f32 %v222, %v1204
    %v1206 = vpop.f32.mrb[0].mxu0
    %v1207 = vadd.f32 %v226, %v1206
    %v1208 = vpop.f32.mrb[0].mxu0
    %v1209 = vpop.f32.mrb[0].mxu0
    %1210 = vdwg.mxu0
    %1211 = vst [vmem:[#allocation5] sm:$0xff] %v918
    %1212 = vst [vmem:[#allocation5 + $0x8] sm:$0xff] %v920
    %1213 = vst [vmem:[#allocation5 + $0x10] sm:$0xff] %v959
    %1214 = vst [vmem:[#allocation5 + $0x18] sm:$0xff] %v961
    %1215 = vst [vmem:[#allocation5 + $0x20] sm:$0xff] %v1000
    %1216 = vst [vmem:[#allocation5 + $0x28] sm:$0xff] %v1002
    %1217 = vst [vmem:[#allocation5 + $0x30] sm:$0xff] %v1041
    %1218 = vst [vmem:[#allocation5 + $0x38] sm:$0xff] %v1043
    %1219 = vst [vmem:[#allocation5 + $0x40] sm:$0xff] %v1082
    %1220 = vst [vmem:[#allocation5 + $0x48] sm:$0xff] %v1084
    %1221 = vst [vmem:[#allocation5 + $0x50] sm:$0xff] %v1123
    %1222 = vst [vmem:[#allocation5 + $0x58] sm:$0xff] %v1125
    %1223 = vst [vmem:[#allocation5 + $0x60] sm:$0xff] %v1164
    %1224 = vst [vmem:[#allocation5 + $0x68] sm:$0xff] %v1166
    %1225 = vst [vmem:[#allocation5 + $0x70] sm:$0xff] %v1205
    %1226 = vst [vmem:[#allocation5 + $0x78] sm:$0xff] %v1207
    // Predicated region
    $region18: #{lstm_decoder_step.3} parent=1 // pred_check
      _
    $region19: #{lstm_decoder_step.3} parent=1 // pred_check_branch
      %1228 = sbr.rel (0) target = $region21
    $region20: #{lstm_decoder_step.3} parent=1 // pred_region
      %s1230 = ssub.s32 2048, 2048
      %1231 = vsyncadd [#allocation4], %s1230
      %s1233 = sshll.u32 [#allocation5], 4
      %s1234 = int_to_ptr.vmem [resolvable:$true] %s1233
      %1236 = dma.vmem_to_hbm [thread:$0]  %s1234, 2048, %s3, [#allocation4]
    $region21: #{lstm_decoder_step.3} parent=1 // pred_fallthru
      _
    // Predicated region
    $region22: #{lstm_decoder_step.3} parent=1 // pred_check
      _
    $region23: #{lstm_decoder_step.3} parent=1 // pred_check_branch
      %1238 = sbr.rel (0) target = $region25
    $region24: #{lstm_decoder_step.3} parent=1 // pred_region
      %1239 = dma.done [#allocation4], 2048
    $region25: #{lstm_decoder_step.3} parent=1 // pred_fallthru
      _
    %1240 = vsyncpa [#allocation3], 1
    %1241 = vsyncpa [#allocation4], 1

</llo_original>
